<compile_context>
chip_gen: v6e
topology: v6e:2x2x1
jax: 0.10.0
libtpu: 0.0.40
codegen_flags: <defaults>
</compile_context>

<pallas_src>
import math

import jax
import jax.numpy as jnp
from jax.experimental import pallas as pl
from jax.experimental.pallas import tpu as pltpu


# ----------------------------------------------------------------------------
# Fused kernel: num_layers tanh-RNN layers (time unrolled) + relu + fc head
# ----------------------------------------------------------------------------
def make_fused_kernel(layout, num_layers, seq_length, batch, input_size, hidden):
    T, B, D, H = seq_length, batch, input_size, hidden

    def kernel(slab_ref, o_ref):
        # Time-major input rows: step t lives at rows [t*B, (t+1)*B).
        layer_in = slab_ref[layout["x"] : layout["x"] + T * B, 0:D]   # (T*B, D)

        h_finals = []
        for l in range(num_layers):
            o_wih, o_whh, o_b, d_in = layout["layers"][l]
            w_ih = slab_ref[o_wih : o_wih + d_in, 0:H]                # (d_in, H)
            w_hh = slab_ref[o_whh : o_whh + H, 0:H]                   # (H, H)
            b = slab_ref[o_b : o_b + 1, 0:H]                          # (1, H)

            # Hoisted input projection + bias: one batched matmul per layer.
            u = jnp.dot(layer_in, w_ih, preferred_element_type=jnp.float32) + b

            h = jnp.zeros((B, H), jnp.float32)                        # h_0 = 0
            ys = []
            for t in range(T):  # unrolled; only h@W_hh + tanh is serial
                h = jnp.tanh(
                    jnp.dot(h, w_hh, preferred_element_type=jnp.float32)
                    + u[t * B : (t + 1) * B, :]
                )
                ys.append(h)
            if l + 1 < num_layers:
                layer_in = jnp.concatenate(ys, axis=0)                # (T*B, H)
            h_finals.append(h)                                        # final h

        # hn.view(-1, H): layer-major stack of final hidden states, then ReLU.
        hn = jnp.concatenate(h_finals, axis=0)                        # (L*B, H)
        out = jnp.maximum(hn, 0.0)                                    # relu(relu)

        # Linear(H, 1) as VPU mul + lane reduce (avoids an N=1 MXU dot).
        w_fc = slab_ref[layout["w_fc"] : layout["w_fc"] + 1, 0:H]     # (1, H)
        b_fc = slab_ref[layout["b_fc"] : layout["b_fc"] + 1, 0:1]     # (1, 1)
        o_ref[...] = (
            jnp.sum(out * w_fc, axis=-1, keepdims=True) + b_fc
        ).astype(o_ref.dtype)

    return kernel


# ----------------------------------------------------------------------------
# Wrapper: pack x + all parameters into one 8-row-aligned slab, single DMA.
# ----------------------------------------------------------------------------
def rnn_module_forward(x_btd, params):
    """x_btd: (B, T, input_size), batch_first like the PyTorch module."""
    B, T, D = x_btd.shape
    H = params["w_fc"].shape[0]
    num_layers = len(params["layers"])
    Wd = max(D, H)  # common slab width (lanes)

    def pad_cols(a):
        return jnp.pad(a, ((0, 0), (0, Wd - a.shape[1])))

    def pad_rows(a):
        r = (-a.shape[0]) % 8  # keep every component sublane-aligned
        return jnp.pad(a, ((0, r), (0, 0))) if r else a

    pieces = []
    layout = {"layers": []}
    off = 0

    def add(a):
        nonlocal off
        a = pad_rows(pad_cols(a))
        start = off
        pieces.append(a)
        off += a.shape[0]
        return start

    # Time-major input: (B,T,D) -> (T,B,D) -> (T*B, D).
    x_tm = jnp.transpose(x_btd, (1, 0, 2)).reshape(T * B, D)
    layout["x"] = add(x_tm)
    for (w_ih, w_hh, b) in params["layers"]:
        d_in = w_ih.shape[0]
        o_wih = add(w_ih)
        o_whh = add(w_hh)
        o_b = add(b)
        layout["layers"].append((o_wih, o_whh, o_b, d_in))
    layout["w_fc"] = add(params["w_fc"].T)        # (1, H)
    layout["b_fc"] = add(params["b_fc"])          # (1, 1)

    slab = jnp.concatenate(pieces, axis=0)        # (R, Wd), single input
    R = slab.shape[0]

    return pl.pallas_call(
        make_fused_kernel(layout, num_layers, T, B, D, H),
        out_shape=jax.ShapeDtypeStruct((num_layers * B, 1), jnp.float32),
        in_specs=[pl.BlockSpec((R, Wd), lambda: (0, 0))],
        out_specs=pl.BlockSpec((num_layers * B, 1), lambda: (0, 0)),
        compiler_params=pltpu.CompilerParams(vmem_limit_bytes=32 * 1024 * 1024),
    )(slab)


# ----------------------------------------------------------------------------
# Deterministic parameter init (mirrors nn.RNN / nn.Linear uniform(-k, k))
# ----------------------------------------------------------------------------
def init_params(key, input_size, hidden_size, num_layers):
    k = 1.0 / math.sqrt(hidden_size)
    layers = []
    for l in range(num_layers):
        d_in = input_size if l == 0 else hidden_size
        key, k1, k2, k3, k4 = jax.random.split(key, 5)
        w_ih = jax.random.uniform(k1, (d_in, hidden_size), jnp.float32, -k, k)
        w_hh = jax.random.uniform(k2, (hidden_size, hidden_size), jnp.float32, -k, k)
        b_ih = jax.random.uniform(k3, (1, hidden_size), jnp.float32, -k, k)
        b_hh = jax.random.uniform(k4, (1, hidden_size), jnp.float32, -k, k)
        layers.append((w_ih, w_hh, b_ih + b_hh))
    key, k5, k6 = jax.random.split(key, 3)
    w_fc = jax.random.uniform(k5, (hidden_size, 1), jnp.float32, -k, k)
    b_fc = jax.random.uniform(k6, (1, 1), jnp.float32, -k, k)
    return {"layers": layers, "w_fc": w_fc, "b_fc": b_fc}


# Pure-JAX reference for verification
def reference_forward(x_btd, params):
    x = jnp.transpose(x_btd, (1, 0, 2))  # (T, B, D)
    h_finals = []
    for (w_ih, w_hh, b) in params["layers"]:
        B = x.shape[1]
        H = w_hh.shape[0]
        h = jnp.zeros((B, H), jnp.float32)
        ys = []
        for t in range(x.shape[0]):
            h = jnp.tanh(x[t] @ w_ih + h @ w_hh + b)
            ys.append(h)
        x = jnp.stack(ys, axis=0)
        h_finals.append(h)
    hn_flat = jnp.stack(h_finals, 0).reshape(-1, h_finals[0].shape[-1])
    out = jnp.maximum(hn_flat, 0.0)
    out = jnp.maximum(out, 0.0)
    return out @ params["w_fc"] + params["b_fc"]


if __name__ == "__main__":
    input_size, hidden_size, num_layers, seq_length = 4, 32, 2, 8
    batch = 2

    key = jax.random.PRNGKey(0)
    key, pkey, xkey = jax.random.split(key, 3)
    params = init_params(pkey, input_size, hidden_size, num_layers)
    x = jax.random.normal(xkey, (batch, seq_length, input_size), jnp.float32)

    out = rnn_module_forward(x, params)
    out = jax.block_until_ready(out)

    ref = reference_forward(x, params)
    assert out.shape == (num_layers * batch, 1)
    assert jnp.allclose(out, ref, atol=1e-4, rtol=1e-4)

    print("KERNEL_OK")
</pallas_src>

<mosaic_0001>
module attributes {stable_mosaic.version = 11 : i64} {
  func.func @kernel(%arg0: memref<152x32xf32, #tpu.memory_space<vmem>>, %arg1: memref<4x1xf32, #tpu.memory_space<vmem>>) attributes {dimension_semantics = [], scalar_prefetch = 0 : i64, scratch_operands = 0 : i64, tpu.core_type = #tpu.core_type<tc>} {
    %c0 = arith.constant 0 : index
    %c0_0 = arith.constant 0 : index
    %0 = vector.load %arg0[%c0, %c0_0] : memref<152x32xf32, #tpu.memory_space<vmem>>, vector<16x4xf32>
    %c16 = arith.constant 16 : index
    %c0_1 = arith.constant 0 : index
    %1 = vector.load %arg0[%c16, %c0_1] : memref<152x32xf32, #tpu.memory_space<vmem>>, vector<4x32xf32>
    %c24 = arith.constant 24 : index
    %c0_2 = arith.constant 0 : index
    %2 = vector.load %arg0[%c24, %c0_2] : memref<152x32xf32, #tpu.memory_space<vmem>>, vector<32x32xf32>
    %c56 = arith.constant 56 : index
    %c0_3 = arith.constant 0 : index
    %3 = vector.load %arg0[%c56, %c0_3] : memref<152x32xf32, #tpu.memory_space<vmem>>, vector<1x32xf32>
    %cst = arith.constant dense<0.000000e+00> : vector<16x32xf32>
    %4 = tpu.matmul %0, %1, %cst {dimension_numbers = #tpu.dot_dimension_numbers<[1], [0], [0], [1], [0, 0, 1, 1], [], []>} : vector<16x4xf32>, vector<4x32xf32>, vector<16x32xf32> -> vector<16x32xf32>
    %5 = vector.broadcast %3 : vector<1x32xf32> to vector<16x32xf32>
    %6 = arith.addf %4, %5 : vector<16x32xf32>
    %cst_4 = arith.constant 0.000000e+00 : f32
    %7 = vector.broadcast %cst_4 : f32 to vector<2x32xf32>
    %cst_5 = arith.constant dense<0.000000e+00> : vector<2x32xf32>
    %8 = tpu.matmul %7, %2, %cst_5 {dimension_numbers = #tpu.dot_dimension_numbers<[1], [0], [0], [1], [0, 0, 1, 1], [], []>} : vector<2x32xf32>, vector<32x32xf32>, vector<2x32xf32> -> vector<2x32xf32>
    %9 = vector.extract_strided_slice %6 {offsets = [0, 0], sizes = [2, 32], strides = [1, 1]} : vector<16x32xf32> to vector<2x32xf32>
    %10 = arith.addf %8, %9 : vector<2x32xf32>
    %11 = math.tanh %10 : vector<2x32xf32>
    %cst_6 = arith.constant dense<0.000000e+00> : vector<2x32xf32>
    %12 = tpu.matmul %11, %2, %cst_6 {dimension_numbers = #tpu.dot_dimension_numbers<[1], [0], [0], [1], [0, 0, 1, 1], [], []>} : vector<2x32xf32>, vector<32x32xf32>, vector<2x32xf32> -> vector<2x32xf32>
    %13 = vector.extract_strided_slice %6 {offsets = [2, 0], sizes = [2, 32], strides = [1, 1]} : vector<16x32xf32> to vector<2x32xf32>
    %14 = arith.addf %12, %13 : vector<2x32xf32>
    %15 = math.tanh %14 : vector<2x32xf32>
    %cst_7 = arith.constant dense<0.000000e+00> : vector<2x32xf32>
    %16 = tpu.matmul %15, %2, %cst_7 {dimension_numbers = #tpu.dot_dimension_numbers<[1], [0], [0], [1], [0, 0, 1, 1], [], []>} : vector<2x32xf32>, vector<32x32xf32>, vector<2x32xf32> -> vector<2x32xf32>
    %17 = vector.extract_strided_slice %6 {offsets = [4, 0], sizes = [2, 32], strides = [1, 1]} : vector<16x32xf32> to vector<2x32xf32>
    %18 = arith.addf %16, %17 : vector<2x32xf32>
    %19 = math.tanh %18 : vector<2x32xf32>
    %cst_8 = arith.constant dense<0.000000e+00> : vector<2x32xf32>
    %20 = tpu.matmul %19, %2, %cst_8 {dimension_numbers = #tpu.dot_dimension_numbers<[1], [0], [0], [1], [0, 0, 1, 1], [], []>} : vector<2x32xf32>, vector<32x32xf32>, vector<2x32xf32> -> vector<2x32xf32>
    %21 = vector.extract_strided_slice %6 {offsets = [6, 0], sizes = [2, 32], strides = [1, 1]} : vector<16x32xf32> to vector<2x32xf32>
    %22 = arith.addf %20, %21 : vector<2x32xf32>
    %23 = math.tanh %22 : vector<2x32xf32>
    %cst_9 = arith.constant dense<0.000000e+00> : vector<2x32xf32>
    %24 = tpu.matmul %23, %2, %cst_9 {dimension_numbers = #tpu.dot_dimension_numbers<[1], [0], [0], [1], [0, 0, 1, 1], [], []>} : vector<2x32xf32>, vector<32x32xf32>, vector<2x32xf32> -> vector<2x32xf32>
    %25 = vector.extract_strided_slice %6 {offsets = [8, 0], sizes = [2, 32], strides = [1, 1]} : vector<16x32xf32> to vector<2x32xf32>
    %26 = arith.addf %24, %25 : vector<2x32xf32>
    %27 = math.tanh %26 : vector<2x32xf32>
    %cst_10 = arith.constant dense<0.000000e+00> : vector<2x32xf32>
    %28 = tpu.matmul %27, %2, %cst_10 {dimension_numbers = #tpu.dot_dimension_numbers<[1], [0], [0], [1], [0, 0, 1, 1], [], []>} : vector<2x32xf32>, vector<32x32xf32>, vector<2x32xf32> -> vector<2x32xf32>
    %29 = vector.extract_strided_slice %6 {offsets = [10, 0], sizes = [2, 32], strides = [1, 1]} : vector<16x32xf32> to vector<2x32xf32>
    %30 = arith.addf %28, %29 : vector<2x32xf32>
    %31 = math.tanh %30 : vector<2x32xf32>
    %cst_11 = arith.constant dense<0.000000e+00> : vector<2x32xf32>
    %32 = tpu.matmul %31, %2, %cst_11 {dimension_numbers = #tpu.dot_dimension_numbers<[1], [0], [0], [1], [0, 0, 1, 1], [], []>} : vector<2x32xf32>, vector<32x32xf32>, vector<2x32xf32> -> vector<2x32xf32>
    %33 = vector.extract_strided_slice %6 {offsets = [12, 0], sizes = [2, 32], strides = [1, 1]} : vector<16x32xf32> to vector<2x32xf32>
    %34 = arith.addf %32, %33 : vector<2x32xf32>
    %35 = math.tanh %34 : vector<2x32xf32>
    %cst_12 = arith.constant dense<0.000000e+00> : vector<2x32xf32>
    %36 = tpu.matmul %35, %2, %cst_12 {dimension_numbers = #tpu.dot_dimension_numbers<[1], [0], [0], [1], [0, 0, 1, 1], [], []>} : vector<2x32xf32>, vector<32x32xf32>, vector<2x32xf32> -> vector<2x32xf32>
    %37 = vector.extract_strided_slice %6 {offsets = [14, 0], sizes = [2, 32], strides = [1, 1]} : vector<16x32xf32> to vector<2x32xf32>
    %38 = arith.addf %36, %37 : vector<2x32xf32>
    %39 = math.tanh %38 : vector<2x32xf32>
    %40 = tpu.concatenate %11, %15, %19, %23, %27, %31, %35, %39 in 0 : vector<2x32xf32>, vector<2x32xf32>, vector<2x32xf32>, vector<2x32xf32>, vector<2x32xf32>, vector<2x32xf32>, vector<2x32xf32>, vector<2x32xf32> -> vector<16x32xf32>
    %c64 = arith.constant 64 : index
    %c0_13 = arith.constant 0 : index
    %41 = vector.load %arg0[%c64, %c0_13] : memref<152x32xf32, #tpu.memory_space<vmem>>, vector<32x32xf32>
    %c96 = arith.constant 96 : index
    %c0_14 = arith.constant 0 : index
    %42 = vector.load %arg0[%c96, %c0_14] : memref<152x32xf32, #tpu.memory_space<vmem>>, vector<32x32xf32>
    %c128 = arith.constant 128 : index
    %c0_15 = arith.constant 0 : index
    %43 = vector.load %arg0[%c128, %c0_15] : memref<152x32xf32, #tpu.memory_space<vmem>>, vector<1x32xf32>
    %cst_16 = arith.constant dense<0.000000e+00> : vector<16x32xf32>
    %44 = tpu.matmul %40, %41, %cst_16 {dimension_numbers = #tpu.dot_dimension_numbers<[1], [0], [0], [1], [0, 0, 1, 1], [], []>} : vector<16x32xf32>, vector<32x32xf32>, vector<16x32xf32> -> vector<16x32xf32>
    %45 = vector.broadcast %43 : vector<1x32xf32> to vector<16x32xf32>
    %46 = arith.addf %44, %45 : vector<16x32xf32>
    %cst_17 = arith.constant 0.000000e+00 : f32
    %47 = vector.broadcast %cst_17 : f32 to vector<2x32xf32>
    %cst_18 = arith.constant dense<0.000000e+00> : vector<2x32xf32>
    %48 = tpu.matmul %47, %42, %cst_18 {dimension_numbers = #tpu.dot_dimension_numbers<[1], [0], [0], [1], [0, 0, 1, 1], [], []>} : vector<2x32xf32>, vector<32x32xf32>, vector<2x32xf32> -> vector<2x32xf32>
    %49 = vector.extract_strided_slice %46 {offsets = [0, 0], sizes = [2, 32], strides = [1, 1]} : vector<16x32xf32> to vector<2x32xf32>
    %50 = arith.addf %48, %49 : vector<2x32xf32>
    %51 = math.tanh %50 : vector<2x32xf32>
    %cst_19 = arith.constant dense<0.000000e+00> : vector<2x32xf32>
    %52 = tpu.matmul %51, %42, %cst_19 {dimension_numbers = #tpu.dot_dimension_numbers<[1], [0], [0], [1], [0, 0, 1, 1], [], []>} : vector<2x32xf32>, vector<32x32xf32>, vector<2x32xf32> -> vector<2x32xf32>
    %53 = vector.extract_strided_slice %46 {offsets = [2, 0], sizes = [2, 32], strides = [1, 1]} : vector<16x32xf32> to vector<2x32xf32>
    %54 = arith.addf %52, %53 : vector<2x32xf32>
    %55 = math.tanh %54 : vector<2x32xf32>
    %cst_20 = arith.constant dense<0.000000e+00> : vector<2x32xf32>
    %56 = tpu.matmul %55, %42, %cst_20 {dimension_numbers = #tpu.dot_dimension_numbers<[1], [0], [0], [1], [0, 0, 1, 1], [], []>} : vector<2x32xf32>, vector<32x32xf32>, vector<2x32xf32> -> vector<2x32xf32>
    %57 = vector.extract_strided_slice %46 {offsets = [4, 0], sizes = [2, 32], strides = [1, 1]} : vector<16x32xf32> to vector<2x32xf32>
    %58 = arith.addf %56, %57 : vector<2x32xf32>
    %59 = math.tanh %58 : vector<2x32xf32>
    %cst_21 = arith.constant dense<0.000000e+00> : vector<2x32xf32>
    %60 = tpu.matmul %59, %42, %cst_21 {dimension_numbers = #tpu.dot_dimension_numbers<[1], [0], [0], [1], [0, 0, 1, 1], [], []>} : vector<2x32xf32>, vector<32x32xf32>, vector<2x32xf32> -> vector<2x32xf32>
    %61 = vector.extract_strided_slice %46 {offsets = [6, 0], sizes = [2, 32], strides = [1, 1]} : vector<16x32xf32> to vector<2x32xf32>
    %62 = arith.addf %60, %61 : vector<2x32xf32>
    %63 = math.tanh %62 : vector<2x32xf32>
    %cst_22 = arith.constant dense<0.000000e+00> : vector<2x32xf32>
    %64 = tpu.matmul %63, %42, %cst_22 {dimension_numbers = #tpu.dot_dimension_numbers<[1], [0], [0], [1], [0, 0, 1, 1], [], []>} : vector<2x32xf32>, vector<32x32xf32>, vector<2x32xf32> -> vector<2x32xf32>
    %65 = vector.extract_strided_slice %46 {offsets = [8, 0], sizes = [2, 32], strides = [1, 1]} : vector<16x32xf32> to vector<2x32xf32>
    %66 = arith.addf %64, %65 : vector<2x32xf32>
    %67 = math.tanh %66 : vector<2x32xf32>
    %cst_23 = arith.constant dense<0.000000e+00> : vector<2x32xf32>
    %68 = tpu.matmul %67, %42, %cst_23 {dimension_numbers = #tpu.dot_dimension_numbers<[1], [0], [0], [1], [0, 0, 1, 1], [], []>} : vector<2x32xf32>, vector<32x32xf32>, vector<2x32xf32> -> vector<2x32xf32>
    %69 = vector.extract_strided_slice %46 {offsets = [10, 0], sizes = [2, 32], strides = [1, 1]} : vector<16x32xf32> to vector<2x32xf32>
    %70 = arith.addf %68, %69 : vector<2x32xf32>
    %71 = math.tanh %70 : vector<2x32xf32>
    %cst_24 = arith.constant dense<0.000000e+00> : vector<2x32xf32>
    %72 = tpu.matmul %71, %42, %cst_24 {dimension_numbers = #tpu.dot_dimension_numbers<[1], [0], [0], [1], [0, 0, 1, 1], [], []>} : vector<2x32xf32>, vector<32x32xf32>, vector<2x32xf32> -> vector<2x32xf32>
    %73 = vector.extract_strided_slice %46 {offsets = [12, 0], sizes = [2, 32], strides = [1, 1]} : vector<16x32xf32> to vector<2x32xf32>
    %74 = arith.addf %72, %73 : vector<2x32xf32>
    %75 = math.tanh %74 : vector<2x32xf32>
    %cst_25 = arith.constant dense<0.000000e+00> : vector<2x32xf32>
    %76 = tpu.matmul %75, %42, %cst_25 {dimension_numbers = #tpu.dot_dimension_numbers<[1], [0], [0], [1], [0, 0, 1, 1], [], []>} : vector<2x32xf32>, vector<32x32xf32>, vector<2x32xf32> -> vector<2x32xf32>
    %77 = vector.extract_strided_slice %46 {offsets = [14, 0], sizes = [2, 32], strides = [1, 1]} : vector<16x32xf32> to vector<2x32xf32>
    %78 = arith.addf %76, %77 : vector<2x32xf32>
    %79 = math.tanh %78 : vector<2x32xf32>
    %80 = tpu.concatenate %39, %79 in 0 : vector<2x32xf32>, vector<2x32xf32> -> vector<4x32xf32>
    %cst_26 = arith.constant 0.000000e+00 : f32
    %81 = vector.broadcast %cst_26 : f32 to vector<4x32xf32>
    %82 = arith.maximumf %80, %81 : vector<4x32xf32>
    %c136 = arith.constant 136 : index
    %c0_27 = arith.constant 0 : index
    %83 = vector.load %arg0[%c136, %c0_27] : memref<152x32xf32, #tpu.memory_space<vmem>>, vector<1x32xf32>
    %c144 = arith.constant 144 : index
    %c0_28 = arith.constant 0 : index
    %84 = vector.load %arg0[%c144, %c0_28] : memref<152x32xf32, #tpu.memory_space<vmem>>, vector<1x1xf32>
    %85 = vector.broadcast %83 : vector<1x32xf32> to vector<4x32xf32>
    %86 = arith.mulf %82, %85 : vector<4x32xf32>
    %cst_29 = arith.constant dense<0.000000e+00> : vector<4xf32>
    %87 = vector.multi_reduction <add>, %86, %cst_29 [1] : vector<4x32xf32> to vector<4xf32>
    %88 = vector.shape_cast %87 : vector<4xf32> to vector<4x1xf32>
    %89 = vector.broadcast %84 : vector<1x1xf32> to vector<4x1xf32>
    %90 = arith.addf %88, %89 : vector<4x1xf32>
    %c0_30 = arith.constant 0 : index
    %c0_31 = arith.constant 0 : index
    %91 = vector.load %arg1[%c0_30, %c0_31] : memref<4x1xf32, #tpu.memory_space<vmem>>, vector<4x1xf32>
    tpu.vector_store %arg1[%c0_30, %c0_31], %90 {strides = array<i32>} : memref<4x1xf32, #tpu.memory_space<vmem>>, vector<4x1xf32>,
    return
  }
}

</mosaic_0001>

<llo_original>
// kernel: tpu_custom_call.1
$region0: #{tpu_custom_call.1}
  #allocation0 [shape = 'u32[]', space=smem, size = 0x4, offset = 0x4, fixed_abs, tag = 'smem constant byte address 0x4 - core index']
  #allocation1 [shape = 'u32[144,128]{1,0:T(1,128)}', space=vmem, size = 0x12000, scoped, tag = 'internal scratch']
  %s0 = inlined_call_operand.vmem [shape: f32[152,32], index: 0, kind: input, shape index: {}]
  %s1 = inlined_call_operand.vmem [shape: f32[4,1], index: 1, kind: output, shape index: {}]
  %s2 = sld [smem:[#allocation0]]
  $region14: #{tpu_custom_call.1} parent=0
    _
  %s4 = ssub.s32 1, %s2
  %s5 = scalar_select 0, %s4, %s2
  // Predicated region
  $region2: #{tpu_custom_call.1} parent=0 // pred_check
    _
  $region3: #{tpu_custom_call.1} parent=0 // pred_check_branch
    %7 = sbr.rel (0) target = $region5
  $region4: #{tpu_custom_call.1} parent=0 // pred_region
    _
  $region5: #{tpu_custom_call.1} parent=0 // pred_fallthru
    _
  %v8 = vld [vmem:[%s0] sm:$0xff]
  %v9 = vld [vmem:[%s0 + $0x8] sm:$0xff]
  %v10 = vld [vmem:[%s0 + $0x10] sm:$0xf]
  %v11 = vld [vmem:[%s0 + $0x18] sm:$0xff]
  %v12 = vld [vmem:[%s0 + $0x20] sm:$0xff]
  %v13 = vld [vmem:[%s0 + $0x28] sm:$0xff]
  %v14 = vld [vmem:[%s0 + $0x30] sm:$0xff]
  %v15 = vld [vmem:[%s0 + $0x38] sm:$0x1]
  %v16 = vlaneseq
  %v17 = vshrl.u32 %v16, 7
  %v18 = vsub.s32 0, %v17
  %v19 = vrot.slane %v15, %v18
  %vm20 = vcmask 31744
  %v22 = vsel %vm20, %v8, 0
  %v25 = vsel %vm20, %v9, 0
  %vm27 = vcmask 1043456
  %v29 = vsel %vm27, %v10, 0
  %31 = vmatprep.subr.mxu0 0.0
  %32 = vmatpush1.msra.mxu0 0.0
  %33 = vmatprep.subr.mxu0 0.0
  %34 = vmatpush1.msra.mxu0 0.0
  %35 = vmatprep.subr.mxu0 0.0
  %36 = vmatpush1.msra.mxu0 0.0
  %37 = vmatprep.subr.mxu0 0.0
  %38 = vmatpush1.msra.mxu0 0.0
  %39 = vmatprep.subr.mxu0 0.0
  %40 = vmatpush1.msra.mxu0 0.0
  %41 = vmatprep.subr.mxu0 0.0
  %42 = vmatpush1.msra.mxu0 0.0
  %43 = vmatprep.subr.mxu0 0.0
  %44 = vmatpush1.msra.mxu0 0.0
  %45 = vmatprep.subr.mxu0 0.0
  %46 = vmatpush1.msra.mxu0 0.0
  %47 = vmatprep.subr.mxu0 0.0
  %48 = vmatpush1.msra.mxu0 0.0
  %49 = vmatprep.subr.mxu0 0.0
  %50 = vmatpush1.msra.mxu0 0.0
  %51 = vmatprep.subr.mxu0 0.0
  %52 = vmatpush1.msra.mxu0 0.0
  %53 = vmatprep.subr.mxu0 0.0
  %54 = vmatpush1.msra.mxu0 0.0
  %55 = vmatprep.subr.mxu0 0.0
  %56 = vmatpush1.msra.mxu0 0.0
  %57 = vmatprep.subr.mxu0 0.0
  %58 = vmatpush1.msra.mxu0 0.0
  %59 = vmatprep.subr.mxu0 0.0
  %60 = vmatpush1.msra.mxu0 0.0
  %61 = vmatprep.subr.mxu0 0.0
  %62 = vmatpush1.msra.mxu0 %v29
  %63 = vmatprep.subr.mxu0 0.0
  %64 = vmatpush2.msra.mxu0 0.0
  %65 = vmatprep.subr.mxu0 0.0
  %66 = vmatpush2.msra.mxu0 0.0
  %67 = vmatprep.subr.mxu0 0.0
  %68 = vmatpush2.msra.mxu0 0.0
  %69 = vmatprep.subr.mxu0 0.0
  %70 = vmatpush2.msra.mxu0 0.0
  %71 = vmatprep.subr.mxu0 0.0
  %72 = vmatpush2.msra.mxu0 0.0
  %73 = vmatprep.subr.mxu0 0.0
  %74 = vmatpush2.msra.mxu0 0.0
  %75 = vmatprep.subr.mxu0 0.0
  %76 = vmatpush2.msra.mxu0 0.0
  %77 = vmatprep.subr.mxu0 0.0
  %78 = vmatpush2.msra.mxu0 0.0
  %79 = vmatprep.subr.mxu0 0.0
  %80 = vmatpush2.msra.mxu0 0.0
  %81 = vmatprep.subr.mxu0 0.0
  %82 = vmatpush2.msra.mxu0 0.0
  %83 = vmatprep.subr.mxu0 0.0
  %84 = vmatpush2.msra.mxu0 0.0
  %85 = vmatprep.subr.mxu0 0.0
  %86 = vmatpush2.msra.mxu0 0.0
  %87 = vmatprep.subr.mxu0 0.0
  %88 = vmatpush2.msra.mxu0 0.0
  %89 = vmatprep.subr.mxu0 0.0
  %90 = vmatpush2.msra.mxu0 0.0
  %91 = vmatprep.subr.mxu0 0.0
  %92 = vmatpush2.msra.mxu0 0.0
  %93 = vmatprep.subr.mxu0 0.0
  %94 = vmatpush2.msra.mxu0 0.0
  %95 = vmatprep.mubr.f32.mxu0 0.0
  %96 = vmatmul.mubr.f32.gmra.mxu0 %v22
  %v97 = vpop.f32.mrf.mxu0
  %v98 = vadd.f32 %v19, %v97
  %v99 = vpop.f32.mrf.mxu0
  %100 = vmatprep.mubr.f32.mxu0 0.0
  %101 = vmatmul.mubr.f32.gmra.mxu0 %v25
  %v102 = vpop.f32.mrf.mxu0
  %v103 = vadd.f32 %v19, %v102
  %v104 = vpop.f32.mrf.mxu0
  %105 = vdwg.mxu0
  %vm106 = vcmask 261120
  %v108 = vsel %vm106, 0.0, 0
  %110 = vmatprep.subr.mxu0 0.0
  %111 = vmatpush1.msra.mxu0 0.0
  %112 = vmatprep.subr.mxu0 0.0
  %113 = vmatpush1.msra.mxu0 0.0
  %114 = vmatprep.subr.mxu0 0.0
  %115 = vmatpush1.msra.mxu0 0.0
  %116 = vmatprep.subr.mxu0 0.0
  %117 = vmatpush1.msra.mxu0 0.0
  %118 = vmatprep.subr.mxu0 0.0
  %119 = vmatpush1.msra.mxu0 0.0
  %120 = vmatprep.subr.mxu0 0.0
  %121 = vmatpush1.msra.mxu0 0.0
  %122 = vmatprep.subr.mxu0 0.0
  %123 = vmatpush1.msra.mxu0 0.0
  %124 = vmatprep.subr.mxu0 0.0
  %125 = vmatpush1.msra.mxu0 0.0
  %126 = vmatprep.subr.mxu0 0.0
  %127 = vmatpush1.msra.mxu0 0.0
  %128 = vmatprep.subr.mxu0 0.0
  %129 = vmatpush1.msra.mxu0 0.0
  %130 = vmatprep.subr.mxu0 0.0
  %131 = vmatpush1.msra.mxu0 0.0
  %132 = vmatprep.subr.mxu0 0.0
  %133 = vmatpush1.msra.mxu0 0.0
  %134 = vmatprep.subr.mxu0 0.0
  %135 = vmatpush1.msra.mxu0 %v14
  %136 = vmatprep.subr.mxu0 0.0
  %137 = vmatpush1.msra.mxu0 %v13
  %138 = vmatprep.subr.mxu0 0.0
  %139 = vmatpush1.msra.mxu0 %v12
  %140 = vmatprep.subr.mxu0 0.0
  %141 = vmatpush1.msra.mxu0 %v11
  %142 = vmatprep.subr.mxu0 0.0
  %143 = vmatpush2.msra.mxu0 0.0
  %144 = vmatprep.subr.mxu0 0.0
  %145 = vmatpush2.msra.mxu0 0.0
  %146 = vmatprep.subr.mxu0 0.0
  %147 = vmatpush2.msra.mxu0 0.0
  %148 = vmatprep.subr.mxu0 0.0
  %149 = vmatpush2.msra.mxu0 0.0
  %150 = vmatprep.subr.mxu0 0.0
  %151 = vmatpush2.msra.mxu0 0.0
  %152 = vmatprep.subr.mxu0 0.0
  %153 = vmatpush2.msra.mxu0 0.0
  %154 = vmatprep.subr.mxu0 0.0
  %155 = vmatpush2.msra.mxu0 0.0
  %156 = vmatprep.subr.mxu0 0.0
  %157 = vmatpush2.msra.mxu0 0.0
  %158 = vmatprep.subr.mxu0 0.0
  %159 = vmatpush2.msra.mxu0 0.0
  %160 = vmatprep.subr.mxu0 0.0
  %161 = vmatpush2.msra.mxu0 0.0
  %162 = vmatprep.subr.mxu0 0.0
  %163 = vmatpush2.msra.mxu0 0.0
  %164 = vmatprep.subr.mxu0 0.0
  %165 = vmatpush2.msra.mxu0 0.0
  %166 = vmatprep.subr.mxu0 0.0
  %167 = vmatpush2.msra.mxu0 0.0
  %168 = vmatprep.subr.mxu0 0.0
  %169 = vmatpush2.msra.mxu0 0.0
  %170 = vmatprep.subr.mxu0 0.0
  %171 = vmatpush2.msra.mxu0 0.0
  %172 = vmatprep.subr.mxu0 0.0
  %173 = vmatpush2.msra.mxu0 0.0
  %174 = vmatprep.mubr.f32.mxu0 0.0
  %175 = vmatmul.mubr.f32.gmra.mxu0 %v108
  %v176 = vpop.f32.mrf.mxu0
  %v177 = vadd.f32 %v98, %v176
  %v178 = vpop.f32.mrf.mxu0
  %179 = vdwg.mxu0
  %v180 = vtanh.pop %v177
  %v182 = vrot.slane %v98, 2
  %v185 = vsel %vm106, %v180, 0
  %187 = vmatprep.subr.mxu0 0.0
  %188 = vmatpush1.msra.mxu0 0.0
  %189 = vmatprep.subr.mxu0 0.0
  %190 = vmatpush1.msra.mxu0 0.0
  %191 = vmatprep.subr.mxu0 0.0
  %192 = vmatpush1.msra.mxu0 0.0
  %193 = vmatprep.subr.mxu0 0.0
  %194 = vmatpush1.msra.mxu0 0.0
  %195 = vmatprep.subr.mxu0 0.0
  %196 = vmatpush1.msra.mxu0 0.0
  %197 = vmatprep.subr.mxu0 0.0
  %198 = vmatpush1.msra.mxu0 0.0
  %199 = vmatprep.subr.mxu0 0.0
  %200 = vmatpush1.msra.mxu0 0.0
  %201 = vmatprep.subr.mxu0 0.0
  %202 = vmatpush1.msra.mxu0 0.0
  %203 = vmatprep.subr.mxu0 0.0
  %204 = vmatpush1.msra.mxu0 0.0
  %205 = vmatprep.subr.mxu0 0.0
  %206 = vmatpush1.msra.mxu0 0.0
  %207 = vmatprep.subr.mxu0 0.0
  %208 = vmatpush1.msra.mxu0 0.0
  %209 = vmatprep.subr.mxu0 0.0
  %210 = vmatpush1.msra.mxu0 0.0
  %211 = vmatprep.subr.mxu0 0.0
  %212 = vmatpush1.msra.mxu0 %v14
  %213 = vmatprep.subr.mxu0 0.0
  %214 = vmatpush1.msra.mxu0 %v13
  %215 = vmatprep.subr.mxu0 0.0
  %216 = vmatpush1.msra.mxu0 %v12
  %217 = vmatprep.subr.mxu0 0.0
  %218 = vmatpush1.msra.mxu0 %v11
  %219 = vmatprep.subr.mxu0 0.0
  %220 = vmatpush2.msra.mxu0 0.0
  %221 = vmatprep.subr.mxu0 0.0
  %222 = vmatpush2.msra.mxu0 0.0
  %223 = vmatprep.subr.mxu0 0.0
  %224 = vmatpush2.msra.mxu0 0.0
  %225 = vmatprep.subr.mxu0 0.0
  %226 = vmatpush2.msra.mxu0 0.0
  %227 = vmatprep.subr.mxu0 0.0
  %228 = vmatpush2.msra.mxu0 0.0
  %229 = vmatprep.subr.mxu0 0.0
  %230 = vmatpush2.msra.mxu0 0.0
  %231 = vmatprep.subr.mxu0 0.0
  %232 = vmatpush2.msra.mxu0 0.0
  %233 = vmatprep.subr.mxu0 0.0
  %234 = vmatpush2.msra.mxu0 0.0
  %235 = vmatprep.subr.mxu0 0.0
  %236 = vmatpush2.msra.mxu0 0.0
  %237 = vmatprep.subr.mxu0 0.0
  %238 = vmatpush2.msra.mxu0 0.0
  %239 = vmatprep.subr.mxu0 0.0
  %240 = vmatpush2.msra.mxu0 0.0
  %241 = vmatprep.subr.mxu0 0.0
  %242 = vmatpush2.msra.mxu0 0.0
  %243 = vmatprep.subr.mxu0 0.0
  %244 = vmatpush2.msra.mxu0 0.0
  %245 = vmatprep.subr.mxu0 0.0
  %246 = vmatpush2.msra.mxu0 0.0
  %247 = vmatprep.subr.mxu0 0.0
  %248 = vmatpush2.msra.mxu0 0.0
  %249 = vmatprep.subr.mxu0 0.0
  %250 = vmatpush2.msra.mxu0 0.0
  %251 = vmatprep.mubr.f32.mxu0 0.0
  %252 = vmatmul.mubr.f32.gmra.mxu0 %v185
  %v253 = vpop.f32.mrf.mxu0
  %v254 = vadd.f32 %v182, %v253
  %v255 = vpop.f32.mrf.mxu0
  %256 = vdwg.mxu0
  %v257 = vtanh.pop %v254
  %v258 = vrot.slane %v98, 4
  %v261 = vsel %vm106, %v257, 0
  %263 = vmatprep.subr.mxu0 0.0
  %264 = vmatpush1.msra.mxu0 0.0
  %265 = vmatprep.subr.mxu0 0.0
  %266 = vmatpush1.msra.mxu0 0.0
  %267 = vmatprep.subr.mxu0 0.0
  %268 = vmatpush1.msra.mxu0 0.0
  %269 = vmatprep.subr.mxu0 0.0
  %270 = vmatpush1.msra.mxu0 0.0
  %271 = vmatprep.subr.mxu0 0.0
  %272 = vmatpush1.msra.mxu0 0.0
  %273 = vmatprep.subr.mxu0 0.0
  %274 = vmatpush1.msra.mxu0 0.0
  %275 = vmatprep.subr.mxu0 0.0
  %276 = vmatpush1.msra.mxu0 0.0
  %277 = vmatprep.subr.mxu0 0.0
  %278 = vmatpush1.msra.mxu0 0.0
  %279 = vmatprep.subr.mxu0 0.0
  %280 = vmatpush1.msra.mxu0 0.0
  %281 = vmatprep.subr.mxu0 0.0
  %282 = vmatpush1.msra.mxu0 0.0
  %283 = vmatprep.subr.mxu0 0.0
  %284 = vmatpush1.msra.mxu0 0.0
  %285 = vmatprep.subr.mxu0 0.0
  %286 = vmatpush1.msra.mxu0 0.0
  %287 = vmatprep.subr.mxu0 0.0
  %288 = vmatpush1.msra.mxu0 %v14
  %289 = vmatprep.subr.mxu0 0.0
  %290 = vmatpush1.msra.mxu0 %v13
  %291 = vmatprep.subr.mxu0 0.0
  %292 = vmatpush1.msra.mxu0 %v12
  %293 = vmatprep.subr.mxu0 0.0
  %294 = vmatpush1.msra.mxu0 %v11
  %295 = vmatprep.subr.mxu0 0.0
  %296 = vmatpush2.msra.mxu0 0.0
  %297 = vmatprep.subr.mxu0 0.0
  %298 = vmatpush2.msra.mxu0 0.0
  %299 = vmatprep.subr.mxu0 0.0
  %300 = vmatpush2.msra.mxu0 0.0
  %301 = vmatprep.subr.mxu0 0.0
  %302 = vmatpush2.msra.mxu0 0.0
  %303 = vmatprep.subr.mxu0 0.0
  %304 = vmatpush2.msra.mxu0 0.0
  %305 = vmatprep.subr.mxu0 0.0
  %306 = vmatpush2.msra.mxu0 0.0
  %307 = vmatprep.subr.mxu0 0.0
  %308 = vmatpush2.msra.mxu0 0.0
  %309 = vmatprep.subr.mxu0 0.0
  %310 = vmatpush2.msra.mxu0 0.0
  %311 = vmatprep.subr.mxu0 0.0
  %312 = vmatpush2.msra.mxu0 0.0
  %313 = vmatprep.subr.mxu0 0.0
  %314 = vmatpush2.msra.mxu0 0.0
  %315 = vmatprep.subr.mxu0 0.0
  %316 = vmatpush2.msra.mxu0 0.0
  %317 = vmatprep.subr.mxu0 0.0
  %318 = vmatpush2.msra.mxu0 0.0
  %319 = vmatprep.subr.mxu0 0.0
  %320 = vmatpush2.msra.mxu0 0.0
  %321 = vmatprep.subr.mxu0 0.0
  %322 = vmatpush2.msra.mxu0 0.0
  %323 = vmatprep.subr.mxu0 0.0
  %324 = vmatpush2.msra.mxu0 0.0
  %325 = vmatprep.subr.mxu0 0.0
  %326 = vmatpush2.msra.mxu0 0.0
  %327 = vmatprep.mubr.f32.mxu0 0.0
  %328 = vmatmul.mubr.f32.gmra.mxu0 %v261
  %v329 = vpop.f32.mrf.mxu0
  %v330 = vadd.f32 %v258, %v329
  %v331 = vpop.f32.mrf.mxu0
  %332 = vdwg.mxu0
  %v333 = vtanh.pop %v330
  %v334 = vrot.slane %v98, 6
  %v337 = vsel %vm106, %v333, 0
  %339 = vmatprep.subr.mxu0 0.0
  %340 = vmatpush1.msra.mxu0 0.0
  %341 = vmatprep.subr.mxu0 0.0
  %342 = vmatpush1.msra.mxu0 0.0
  %343 = vmatprep.subr.mxu0 0.0
  %344 = vmatpush1.msra.mxu0 0.0
  %345 = vmatprep.subr.mxu0 0.0
  %346 = vmatpush1.msra.mxu0 0.0
  %347 = vmatprep.subr.mxu0 0.0
  %348 = vmatpush1.msra.mxu0 0.0
  %349 = vmatprep.subr.mxu0 0.0
  %350 = vmatpush1.msra.mxu0 0.0
  %351 = vmatprep.subr.mxu0 0.0
  %352 = vmatpush1.msra.mxu0 0.0
  %353 = vmatprep.subr.mxu0 0.0
  %354 = vmatpush1.msra.mxu0 0.0
  %355 = vmatprep.subr.mxu0 0.0
  %356 = vmatpush1.msra.mxu0 0.0
  %357 = vmatprep.subr.mxu0 0.0
  %358 = vmatpush1.msra.mxu0 0.0
  %359 = vmatprep.subr.mxu0 0.0
  %360 = vmatpush1.msra.mxu0 0.0
  %361 = vmatprep.subr.mxu0 0.0
  %362 = vmatpush1.msra.mxu0 0.0
  %363 = vmatprep.subr.mxu0 0.0
  %364 = vmatpush1.msra.mxu0 %v14
  %365 = vmatprep.subr.mxu0 0.0
  %366 = vmatpush1.msra.mxu0 %v13
  %367 = vmatprep.subr.mxu0 0.0
  %368 = vmatpush1.msra.mxu0 %v12
  %369 = vmatprep.subr.mxu0 0.0
  %370 = vmatpush1.msra.mxu0 %v11
  %371 = vmatprep.subr.mxu0 0.0
  %372 = vmatpush2.msra.mxu0 0.0
  %373 = vmatprep.subr.mxu0 0.0
  %374 = vmatpush2.msra.mxu0 0.0
  %375 = vmatprep.subr.mxu0 0.0
  %376 = vmatpush2.msra.mxu0 0.0
  %377 = vmatprep.subr.mxu0 0.0
  %378 = vmatpush2.msra.mxu0 0.0
  %379 = vmatprep.subr.mxu0 0.0
  %380 = vmatpush2.msra.mxu0 0.0
  %381 = vmatprep.subr.mxu0 0.0
  %382 = vmatpush2.msra.mxu0 0.0
  %383 = vmatprep.subr.mxu0 0.0
  %384 = vmatpush2.msra.mxu0 0.0
  %385 = vmatprep.subr.mxu0 0.0
  %386 = vmatpush2.msra.mxu0 0.0
  %387 = vmatprep.subr.mxu0 0.0
  %388 = vmatpush2.msra.mxu0 0.0
  %389 = vmatprep.subr.mxu0 0.0
  %390 = vmatpush2.msra.mxu0 0.0
  %391 = vmatprep.subr.mxu0 0.0
  %392 = vmatpush2.msra.mxu0 0.0
  %393 = vmatprep.subr.mxu0 0.0
  %394 = vmatpush2.msra.mxu0 0.0
  %395 = vmatprep.subr.mxu0 0.0
  %396 = vmatpush2.msra.mxu0 0.0
  %397 = vmatprep.subr.mxu0 0.0
  %398 = vmatpush2.msra.mxu0 0.0
  %399 = vmatprep.subr.mxu0 0.0
  %400 = vmatpush2.msra.mxu0 0.0
  %401 = vmatprep.subr.mxu0 0.0
  %402 = vmatpush2.msra.mxu0 0.0
  %403 = vmatprep.mubr.f32.mxu0 0.0
  %404 = vmatmul.mubr.f32.gmra.mxu0 %v337
  %v405 = vpop.f32.mrf.mxu0
  %v406 = vadd.f32 %v334, %v405
  %v407 = vpop.f32.mrf.mxu0
  %408 = vdwg.mxu0
  %v409 = vtanh.pop %v406
  %v411 = vsel %vm106, %v409, 0
  %413 = vmatprep.subr.mxu0 0.0
  %414 = vmatpush1.msra.mxu0 0.0
  %415 = vmatprep.subr.mxu0 0.0
  %416 = vmatpush1.msra.mxu0 0.0
  %417 = vmatprep.subr.mxu0 0.0
  %418 = vmatpush1.msra.mxu0 0.0
  %419 = vmatprep.subr.mxu0 0.0
  %420 = vmatpush1.msra.mxu0 0.0
  %421 = vmatprep.subr.mxu0 0.0
  %422 = vmatpush1.msra.mxu0 0.0
  %423 = vmatprep.subr.mxu0 0.0
  %424 = vmatpush1.msra.mxu0 0.0
  %425 = vmatprep.subr.mxu0 0.0
  %426 = vmatpush1.msra.mxu0 0.0
  %427 = vmatprep.subr.mxu0 0.0
  %428 = vmatpush1.msra.mxu0 0.0
  %429 = vmatprep.subr.mxu0 0.0
  %430 = vmatpush1.msra.mxu0 0.0
  %431 = vmatprep.subr.mxu0 0.0
  %432 = vmatpush1.msra.mxu0 0.0
  %433 = vmatprep.subr.mxu0 0.0
  %434 = vmatpush1.msra.mxu0 0.0
  %435 = vmatprep.subr.mxu0 0.0
  %436 = vmatpush1.msra.mxu0 0.0
  %437 = vmatprep.subr.mxu0 0.0
  %438 = vmatpush1.msra.mxu0 %v14
  %439 = vmatprep.subr.mxu0 0.0
  %440 = vmatpush1.msra.mxu0 %v13
  %441 = vmatprep.subr.mxu0 0.0
  %442 = vmatpush1.msra.mxu0 %v12
  %443 = vmatprep.subr.mxu0 0.0
  %444 = vmatpush1.msra.mxu0 %v11
  %445 = vmatprep.subr.mxu0 0.0
  %446 = vmatpush2.msra.mxu0 0.0
  %447 = vmatprep.subr.mxu0 0.0
  %448 = vmatpush2.msra.mxu0 0.0
  %449 = vmatprep.subr.mxu0 0.0
  %450 = vmatpush2.msra.mxu0 0.0
  %451 = vmatprep.subr.mxu0 0.0
  %452 = vmatpush2.msra.mxu0 0.0
  %453 = vmatprep.subr.mxu0 0.0
  %454 = vmatpush2.msra.mxu0 0.0
  %455 = vmatprep.subr.mxu0 0.0
  %456 = vmatpush2.msra.mxu0 0.0
  %457 = vmatprep.subr.mxu0 0.0
  %458 = vmatpush2.msra.mxu0 0.0
  %459 = vmatprep.subr.mxu0 0.0
  %460 = vmatpush2.msra.mxu0 0.0
  %461 = vmatprep.subr.mxu0 0.0
  %462 = vmatpush2.msra.mxu0 0.0
  %463 = vmatprep.subr.mxu0 0.0
  %464 = vmatpush2.msra.mxu0 0.0
  %465 = vmatprep.subr.mxu0 0.0
  %466 = vmatpush2.msra.mxu0 0.0
  %467 = vmatprep.subr.mxu0 0.0
  %468 = vmatpush2.msra.mxu0 0.0
  %469 = vmatprep.subr.mxu0 0.0
  %470 = vmatpush2.msra.mxu0 0.0
  %471 = vmatprep.subr.mxu0 0.0
  %472 = vmatpush2.msra.mxu0 0.0
  %473 = vmatprep.subr.mxu0 0.0
  %474 = vmatpush2.msra.mxu0 0.0
  %475 = vmatprep.subr.mxu0 0.0
  %476 = vmatpush2.msra.mxu0 0.0
  %477 = vmatprep.mubr.f32.mxu0 0.0
  %478 = vmatmul.mubr.f32.gmra.mxu0 %v411
  %v479 = vpop.f32.mrf.mxu0
  %v480 = vadd.f32 %v103, %v479
  %v481 = vpop.f32.mrf.mxu0
  %482 = vdwg.mxu0
  %v483 = vtanh.pop %v480
  %v485 = vrot.slane %v103, 2
  %v488 = vsel %vm106, %v483, 0
  %490 = vmatprep.subr.mxu0 0.0
  %491 = vmatpush1.msra.mxu0 0.0
  %492 = vmatprep.subr.mxu0 0.0
  %493 = vmatpush1.msra.mxu0 0.0
  %494 = vmatprep.subr.mxu0 0.0
  %495 = vmatpush1.msra.mxu0 0.0
  %496 = vmatprep.subr.mxu0 0.0
  %497 = vmatpush1.msra.mxu0 0.0
  %498 = vmatprep.subr.mxu0 0.0
  %499 = vmatpush1.msra.mxu0 0.0
  %500 = vmatprep.subr.mxu0 0.0
  %501 = vmatpush1.msra.mxu0 0.0
  %502 = vmatprep.subr.mxu0 0.0
  %503 = vmatpush1.msra.mxu0 0.0
  %504 = vmatprep.subr.mxu0 0.0
  %505 = vmatpush1.msra.mxu0 0.0
  %506 = vmatprep.subr.mxu0 0.0
  %507 = vmatpush1.msra.mxu0 0.0
  %508 = vmatprep.subr.mxu0 0.0
  %509 = vmatpush1.msra.mxu0 0.0
  %510 = vmatprep.subr.mxu0 0.0
  %511 = vmatpush1.msra.mxu0 0.0
  %512 = vmatprep.subr.mxu0 0.0
  %513 = vmatpush1.msra.mxu0 0.0
  %514 = vmatprep.subr.mxu0 0.0
  %515 = vmatpush1.msra.mxu0 %v14
  %516 = vmatprep.subr.mxu0 0.0
  %517 = vmatpush1.msra.mxu0 %v13
  %518 = vmatprep.subr.mxu0 0.0
  %519 = vmatpush1.msra.mxu0 %v12
  %520 = vmatprep.subr.mxu0 0.0
  %521 = vmatpush1.msra.mxu0 %v11
  %522 = vmatprep.subr.mxu0 0.0
  %523 = vmatpush2.msra.mxu0 0.0
  %524 = vmatprep.subr.mxu0 0.0
  %525 = vmatpush2.msra.mxu0 0.0
  %526 = vmatprep.subr.mxu0 0.0
  %527 = vmatpush2.msra.mxu0 0.0
  %528 = vmatprep.subr.mxu0 0.0
  %529 = vmatpush2.msra.mxu0 0.0
  %530 = vmatprep.subr.mxu0 0.0
  %531 = vmatpush2.msra.mxu0 0.0
  %532 = vmatprep.subr.mxu0 0.0
  %533 = vmatpush2.msra.mxu0 0.0
  %534 = vmatprep.subr.mxu0 0.0
  %535 = vmatpush2.msra.mxu0 0.0
  %536 = vmatprep.subr.mxu0 0.0
  %537 = vmatpush2.msra.mxu0 0.0
  %538 = vmatprep.subr.mxu0 0.0
  %539 = vmatpush2.msra.mxu0 0.0
  %540 = vmatprep.subr.mxu0 0.0
  %541 = vmatpush2.msra.mxu0 0.0
  %542 = vmatprep.subr.mxu0 0.0
  %543 = vmatpush2.msra.mxu0 0.0
  %544 = vmatprep.subr.mxu0 0.0
  %545 = vmatpush2.msra.mxu0 0.0
  %546 = vmatprep.subr.mxu0 0.0
  %547 = vmatpush2.msra.mxu0 0.0
  %548 = vmatprep.subr.mxu0 0.0
  %549 = vmatpush2.msra.mxu0 0.0
  %550 = vmatprep.subr.mxu0 0.0
  %551 = vmatpush2.msra.mxu0 0.0
  %552 = vmatprep.subr.mxu0 0.0
  %553 = vmatpush2.msra.mxu0 0.0
  %554 = vmatprep.mubr.f32.mxu0 0.0
  %555 = vmatmul.mubr.f32.gmra.mxu0 %v488
  %v556 = vpop.f32.mrf.mxu0
  %v557 = vadd.f32 %v485, %v556
  %v558 = vpop.f32.mrf.mxu0
  %559 = vdwg.mxu0
  %v560 = vtanh.pop %v557
  %v561 = vrot.slane %v103, 4
  %v564 = vsel %vm106, %v560, 0
  %566 = vmatprep.subr.mxu0 0.0
  %567 = vmatpush1.msra.mxu0 0.0
  %568 = vmatprep.subr.mxu0 0.0
  %569 = vmatpush1.msra.mxu0 0.0
  %570 = vmatprep.subr.mxu0 0.0
  %571 = vmatpush1.msra.mxu0 0.0
  %572 = vmatprep.subr.mxu0 0.0
  %573 = vmatpush1.msra.mxu0 0.0
  %574 = vmatprep.subr.mxu0 0.0
  %575 = vmatpush1.msra.mxu0 0.0
  %576 = vmatprep.subr.mxu0 0.0
  %577 = vmatpush1.msra.mxu0 0.0
  %578 = vmatprep.subr.mxu0 0.0
  %579 = vmatpush1.msra.mxu0 0.0
  %580 = vmatprep.subr.mxu0 0.0
  %581 = vmatpush1.msra.mxu0 0.0
  %582 = vmatprep.subr.mxu0 0.0
  %583 = vmatpush1.msra.mxu0 0.0
  %584 = vmatprep.subr.mxu0 0.0
  %585 = vmatpush1.msra.mxu0 0.0
  %586 = vmatprep.subr.mxu0 0.0
  %587 = vmatpush1.msra.mxu0 0.0
  %588 = vmatprep.subr.mxu0 0.0
  %589 = vmatpush1.msra.mxu0 0.0
  %590 = vmatprep.subr.mxu0 0.0
  %591 = vmatpush1.msra.mxu0 %v14
  %592 = vmatprep.subr.mxu0 0.0
  %593 = vmatpush1.msra.mxu0 %v13
  %594 = vmatprep.subr.mxu0 0.0
  %595 = vmatpush1.msra.mxu0 %v12
  %596 = vmatprep.subr.mxu0 0.0
  %597 = vmatpush1.msra.mxu0 %v11
  %598 = vmatprep.subr.mxu0 0.0
  %599 = vmatpush2.msra.mxu0 0.0
  %600 = vmatprep.subr.mxu0 0.0
  %601 = vmatpush2.msra.mxu0 0.0
  %602 = vmatprep.subr.mxu0 0.0
  %603 = vmatpush2.msra.mxu0 0.0
  %604 = vmatprep.subr.mxu0 0.0
  %605 = vmatpush2.msra.mxu0 0.0
  %606 = vmatprep.subr.mxu0 0.0
  %607 = vmatpush2.msra.mxu0 0.0
  %608 = vmatprep.subr.mxu0 0.0
  %609 = vmatpush2.msra.mxu0 0.0
  %610 = vmatprep.subr.mxu0 0.0
  %611 = vmatpush2.msra.mxu0 0.0
  %612 = vmatprep.subr.mxu0 0.0
  %613 = vmatpush2.msra.mxu0 0.0
  %614 = vmatprep.subr.mxu0 0.0
  %615 = vmatpush2.msra.mxu0 0.0
  %616 = vmatprep.subr.mxu0 0.0
  %617 = vmatpush2.msra.mxu0 0.0
  %618 = vmatprep.subr.mxu0 0.0
  %619 = vmatpush2.msra.mxu0 0.0
  %620 = vmatprep.subr.mxu0 0.0
  %621 = vmatpush2.msra.mxu0 0.0
  %622 = vmatprep.subr.mxu0 0.0
  %623 = vmatpush2.msra.mxu0 0.0
  %624 = vmatprep.subr.mxu0 0.0
  %625 = vmatpush2.msra.mxu0 0.0
  %626 = vmatprep.subr.mxu0 0.0
  %627 = vmatpush2.msra.mxu0 0.0
  %628 = vmatprep.subr.mxu0 0.0
  %629 = vmatpush2.msra.mxu0 0.0
  %630 = vmatprep.mubr.f32.mxu0 0.0
  %631 = vmatmul.mubr.f32.gmra.mxu0 %v564
  %v632 = vpop.f32.mrf.mxu0
  %v633 = vadd.f32 %v561, %v632
  %v634 = vpop.f32.mrf.mxu0
  %635 = vdwg.mxu0
  %v636 = vtanh.pop %v633
  %v637 = vrot.slane %v103, 6
  %v640 = vsel %vm106, %v636, 0
  %642 = vmatprep.subr.mxu0 0.0
  %643 = vmatpush1.msra.mxu0 0.0
  %644 = vmatprep.subr.mxu0 0.0
  %645 = vmatpush1.msra.mxu0 0.0
  %646 = vmatprep.subr.mxu0 0.0
  %647 = vmatpush1.msra.mxu0 0.0
  %648 = vmatprep.subr.mxu0 0.0
  %649 = vmatpush1.msra.mxu0 0.0
  %650 = vmatprep.subr.mxu0 0.0
  %651 = vmatpush1.msra.mxu0 0.0
  %652 = vmatprep.subr.mxu0 0.0
  %653 = vmatpush1.msra.mxu0 0.0
  %654 = vmatprep.subr.mxu0 0.0
  %655 = vmatpush1.msra.mxu0 0.0
  %656 = vmatprep.subr.mxu0 0.0
  %657 = vmatpush1.msra.mxu0 0.0
  %658 = vmatprep.subr.mxu0 0.0
  %659 = vmatpush1.msra.mxu0 0.0
  %660 = vmatprep.subr.mxu0 0.0
  %661 = vmatpush1.msra.mxu0 0.0
  %662 = vmatprep.subr.mxu0 0.0
  %663 = vmatpush1.msra.mxu0 0.0
  %664 = vmatprep.subr.mxu0 0.0
  %665 = vmatpush1.msra.mxu0 0.0
  %666 = vmatprep.subr.mxu0 0.0
  %667 = vmatpush1.msra.mxu0 %v14
  %668 = vmatprep.subr.mxu0 0.0
  %669 = vmatpush1.msra.mxu0 %v13
  %670 = vmatprep.subr.mxu0 0.0
  %671 = vmatpush1.msra.mxu0 %v12
  %672 = vmatprep.subr.mxu0 0.0
  %673 = vmatpush1.msra.mxu0 %v11
  %674 = vmatprep.subr.mxu0 0.0
  %675 = vmatpush2.msra.mxu0 0.0
  %676 = vmatprep.subr.mxu0 0.0
  %677 = vmatpush2.msra.mxu0 0.0
  %678 = vmatprep.subr.mxu0 0.0
  %679 = vmatpush2.msra.mxu0 0.0
  %680 = vmatprep.subr.mxu0 0.0
  %681 = vmatpush2.msra.mxu0 0.0
  %682 = vmatprep.subr.mxu0 0.0
  %683 = vmatpush2.msra.mxu0 0.0
  %684 = vmatprep.subr.mxu0 0.0
  %685 = vmatpush2.msra.mxu0 0.0
  %686 = vmatprep.subr.mxu0 0.0
  %687 = vmatpush2.msra.mxu0 0.0
  %688 = vmatprep.subr.mxu0 0.0
  %689 = vmatpush2.msra.mxu0 0.0
  %690 = vmatprep.subr.mxu0 0.0
  %691 = vmatpush2.msra.mxu0 0.0
  %692 = vmatprep.subr.mxu0 0.0
  %693 = vmatpush2.msra.mxu0 0.0
  %694 = vmatprep.subr.mxu0 0.0
  %695 = vmatpush2.msra.mxu0 0.0
  %696 = vmatprep.subr.mxu0 0.0
  %697 = vmatpush2.msra.mxu0 0.0
  %698 = vmatprep.subr.mxu0 0.0
  %699 = vmatpush2.msra.mxu0 0.0
  %700 = vmatprep.subr.mxu0 0.0
  %701 = vmatpush2.msra.mxu0 0.0
  %702 = vmatprep.subr.mxu0 0.0
  %703 = vmatpush2.msra.mxu0 0.0
  %704 = vmatprep.subr.mxu0 0.0
  %705 = vmatpush2.msra.mxu0 0.0
  %706 = vmatprep.mubr.f32.mxu0 0.0
  %707 = vmatmul.mubr.f32.gmra.mxu0 %v640
  %v708 = vpop.f32.mrf.mxu0
  %v709 = vadd.f32 %v637, %v708
  %v710 = vpop.f32.mrf.mxu0
  %711 = vdwg.mxu0
  %v712 = vtanh.pop %v709
  %v713 = vrot.slane %v257, 6
  %v715 = vrot.slane %v333, 4
  %v717 = vrot.slane %v409, 2
  %v719 = vrot.slane %v560, 6
  %v721 = vrot.slane %v636, 4
  %v724 = vrot.slane %v712, 2
  %vm726 = vcmask 1041408
  %v727 = vsel %vm726, %v180, %v713
  %v728 = vsel %vm27, %v727, %v715
  %vm729 = vcmask 1045504
  %v730 = vsel %vm729, %v728, %v717
  %v731 = vsel %vm726, %v483, %v719
  %v732 = vsel %vm27, %v731, %v721
  %v733 = vsel %vm729, %v732, %v724
  %v734 = vld [vmem:[%s0 + $0x40] sm:$0xff]
  %v735 = vld [vmem:[%s0 + $0x48] sm:$0xff]
  %v736 = vld [vmem:[%s0 + $0x50] sm:$0xff]
  %v737 = vld [vmem:[%s0 + $0x58] sm:$0xff]
  %v738 = vld [vmem:[%s0 + $0x60] sm:$0xff]
  %v739 = vld [vmem:[%s0 + $0x68] sm:$0xff]
  %v740 = vld [vmem:[%s0 + $0x70] sm:$0xff]
  %v741 = vld [vmem:[%s0 + $0x78] sm:$0xff]
  %v742 = vld [vmem:[%s0 + $0x80] sm:$0x1]
  %v743 = vlaneseq
  %v744 = vshrl.u32 %v743, 7
  %v745 = vsub.s32 0, %v744
  %v746 = vrot.slane %v742, %v745
  %v748 = vsel %vm106, %v730, 0
  %v751 = vsel %vm106, %v733, 0
  %753 = vmatprep.subr.mxu0 0.0
  %754 = vmatpush1.msra.mxu0 0.0
  %755 = vmatprep.subr.mxu0 0.0
  %756 = vmatpush1.msra.mxu0 0.0
  %757 = vmatprep.subr.mxu0 0.0
  %758 = vmatpush1.msra.mxu0 0.0
  %759 = vmatprep.subr.mxu0 0.0
  %760 = vmatpush1.msra.mxu0 0.0
  %761 = vmatprep.subr.mxu0 0.0
  %762 = vmatpush1.msra.mxu0 0.0
  %763 = vmatprep.subr.mxu0 0.0
  %764 = vmatpush1.msra.mxu0 0.0
  %765 = vmatprep.subr.mxu0 0.0
  %766 = vmatpush1.msra.mxu0 0.0
  %767 = vmatprep.subr.mxu0 0.0
  %768 = vmatpush1.msra.mxu0 0.0
  %769 = vmatprep.subr.mxu0 0.0
  %770 = vmatpush1.msra.mxu0 0.0
  %771 = vmatprep.subr.mxu0 0.0
  %772 = vmatpush1.msra.mxu0 0.0
  %773 = vmatprep.subr.mxu0 0.0
  %774 = vmatpush1.msra.mxu0 0.0
  %775 = vmatprep.subr.mxu0 0.0
  %776 = vmatpush1.msra.mxu0 0.0
  %777 = vmatprep.subr.mxu0 0.0
  %778 = vmatpush1.msra.mxu0 %v737
  %779 = vmatprep.subr.mxu0 0.0
  %780 = vmatpush1.msra.mxu0 %v736
  %781 = vmatprep.subr.mxu0 0.0
  %782 = vmatpush1.msra.mxu0 %v735
  %783 = vmatprep.subr.mxu0 0.0
  %784 = vmatpush1.msra.mxu0 %v734
  %785 = vmatprep.subr.mxu0 0.0
  %786 = vmatpush2.msra.mxu0 0.0
  %787 = vmatprep.subr.mxu0 0.0
  %788 = vmatpush2.msra.mxu0 0.0
  %789 = vmatprep.subr.mxu0 0.0
  %790 = vmatpush2.msra.mxu0 0.0
  %791 = vmatprep.subr.mxu0 0.0
  %792 = vmatpush2.msra.mxu0 0.0
  %793 = vmatprep.subr.mxu0 0.0
  %794 = vmatpush2.msra.mxu0 0.0
  %795 = vmatprep.subr.mxu0 0.0
  %796 = vmatpush2.msra.mxu0 0.0
  %797 = vmatprep.subr.mxu0 0.0
  %798 = vmatpush2.msra.mxu0 0.0
  %799 = vmatprep.subr.mxu0 0.0
  %800 = vmatpush2.msra.mxu0 0.0
  %801 = vmatprep.subr.mxu0 0.0
  %802 = vmatpush2.msra.mxu0 0.0
  %803 = vmatprep.subr.mxu0 0.0
  %804 = vmatpush2.msra.mxu0 0.0
  %805 = vmatprep.subr.mxu0 0.0
  %806 = vmatpush2.msra.mxu0 0.0
  %807 = vmatprep.subr.mxu0 0.0
  %808 = vmatpush2.msra.mxu0 0.0
  %809 = vmatprep.subr.mxu0 0.0
  %810 = vmatpush2.msra.mxu0 0.0
  %811 = vmatprep.subr.mxu0 0.0
  %812 = vmatpush2.msra.mxu0 0.0
  %813 = vmatprep.subr.mxu0 0.0
  %814 = vmatpush2.msra.mxu0 0.0
  %815 = vmatprep.subr.mxu0 0.0
  %816 = vmatpush2.msra.mxu0 0.0
  %817 = vmatprep.mubr.f32.mxu0 0.0
  %818 = vmatmul.mubr.f32.gmra.mxu0 %v748
  %v819 = vpop.f32.mrf.mxu0
  %v820 = vadd.f32 %v746, %v819
  %v821 = vpop.f32.mrf.mxu0
  %822 = vmatprep.mubr.f32.mxu0 0.0
  %823 = vmatmul.mubr.f32.gmra.mxu0 %v751
  %v824 = vpop.f32.mrf.mxu0
  %v825 = vadd.f32 %v746, %v824
  %v826 = vpop.f32.mrf.mxu0
  %827 = vdwg.mxu0
  %828 = vmatprep.subr.mxu0 0.0
  %829 = vmatpush1.msra.mxu0 0.0
  %830 = vmatprep.subr.mxu0 0.0
  %831 = vmatpush1.msra.mxu0 0.0
  %832 = vmatprep.subr.mxu0 0.0
  %833 = vmatpush1.msra.mxu0 0.0
  %834 = vmatprep.subr.mxu0 0.0
  %835 = vmatpush1.msra.mxu0 0.0
  %836 = vmatprep.subr.mxu0 0.0
  %837 = vmatpush1.msra.mxu0 0.0
  %838 = vmatprep.subr.mxu0 0.0
  %839 = vmatpush1.msra.mxu0 0.0
  %840 = vmatprep.subr.mxu0 0.0
  %841 = vmatpush1.msra.mxu0 0.0
  %842 = vmatprep.subr.mxu0 0.0
  %843 = vmatpush1.msra.mxu0 0.0
  %844 = vmatprep.subr.mxu0 0.0
  %845 = vmatpush1.msra.mxu0 0.0
  %846 = vmatprep.subr.mxu0 0.0
  %847 = vmatpush1.msra.mxu0 0.0
  %848 = vmatprep.subr.mxu0 0.0
  %849 = vmatpush1.msra.mxu0 0.0
  %850 = vmatprep.subr.mxu0 0.0
  %851 = vmatpush1.msra.mxu0 0.0
  %852 = vmatprep.subr.mxu0 0.0
  %853 = vmatpush1.msra.mxu0 %v741
  %854 = vmatprep.subr.mxu0 0.0
  %855 = vmatpush1.msra.mxu0 %v740
  %856 = vmatprep.subr.mxu0 0.0
  %857 = vmatpush1.msra.mxu0 %v739
  %858 = vmatprep.subr.mxu0 0.0
  %859 = vmatpush1.msra.mxu0 %v738
  %860 = vmatprep.subr.mxu0 0.0
  %861 = vmatpush2.msra.mxu0 0.0
  %862 = vmatprep.subr.mxu0 0.0
  %863 = vmatpush2.msra.mxu0 0.0
  %864 = vmatprep.subr.mxu0 0.0
  %865 = vmatpush2.msra.mxu0 0.0
  %866 = vmatprep.subr.mxu0 0.0
  %867 = vmatpush2.msra.mxu0 0.0
  %868 = vmatprep.subr.mxu0 0.0
  %869 = vmatpush2.msra.mxu0 0.0
  %870 = vmatprep.subr.mxu0 0.0
  %871 = vmatpush2.msra.mxu0 0.0
  %872 = vmatprep.subr.mxu0 0.0
  %873 = vmatpush2.msra.mxu0 0.0
  %874 = vmatprep.subr.mxu0 0.0
  %875 = vmatpush2.msra.mxu0 0.0
  %876 = vmatprep.subr.mxu0 0.0
  %877 = vmatpush2.msra.mxu0 0.0
  %878 = vmatprep.subr.mxu0 0.0
  %879 = vmatpush2.msra.mxu0 0.0
  %880 = vmatprep.subr.mxu0 0.0
  %881 = vmatpush2.msra.mxu0 0.0
  %882 = vmatprep.subr.mxu0 0.0
  %883 = vmatpush2.msra.mxu0 0.0
  %884 = vmatprep.subr.mxu0 0.0
  %885 = vmatpush2.msra.mxu0 0.0
  %886 = vmatprep.subr.mxu0 0.0
  %887 = vmatpush2.msra.mxu0 0.0
  %888 = vmatprep.subr.mxu0 0.0
  %889 = vmatpush2.msra.mxu0 0.0
  %890 = vmatprep.subr.mxu0 0.0
  %891 = vmatpush2.msra.mxu0 0.0
  %892 = vmatprep.mubr.f32.mxu0 0.0
  %893 = vmatmul.mubr.f32.gmra.mxu0 %v108
  %v894 = vpop.f32.mrf.mxu0
  %v895 = vadd.f32 %v820, %v894
  %v896 = vpop.f32.mrf.mxu0
  %897 = vdwg.mxu0
  %v898 = vtanh.pop %v895
  %v900 = vrot.slane %v820, 2
  %v903 = vsel %vm106, %v898, 0
  %905 = vmatprep.subr.mxu0 0.0
  %906 = vmatpush1.msra.mxu0 0.0
  %907 = vmatprep.subr.mxu0 0.0
  %908 = vmatpush1.msra.mxu0 0.0
  %909 = vmatprep.subr.mxu0 0.0
  %910 = vmatpush1.msra.mxu0 0.0
  %911 = vmatprep.subr.mxu0 0.0
  %912 = vmatpush1.msra.mxu0 0.0
  %913 = vmatprep.subr.mxu0 0.0
  %914 = vmatpush1.msra.mxu0 0.0
  %915 = vmatprep.subr.mxu0 0.0
  %916 = vmatpush1.msra.mxu0 0.0
  %917 = vmatprep.subr.mxu0 0.0
  %918 = vmatpush1.msra.mxu0 0.0
  %919 = vmatprep.subr.mxu0 0.0
  %920 = vmatpush1.msra.mxu0 0.0
  %921 = vmatprep.subr.mxu0 0.0
  %922 = vmatpush1.msra.mxu0 0.0
  %923 = vmatprep.subr.mxu0 0.0
  %924 = vmatpush1.msra.mxu0 0.0
  %925 = vmatprep.subr.mxu0 0.0
  %926 = vmatpush1.msra.mxu0 0.0
  %927 = vmatprep.subr.mxu0 0.0
  %928 = vmatpush1.msra.mxu0 0.0
  %929 = vmatprep.subr.mxu0 0.0
  %930 = vmatpush1.msra.mxu0 %v741
  %931 = vmatprep.subr.mxu0 0.0
  %932 = vmatpush1.msra.mxu0 %v740
  %933 = vmatprep.subr.mxu0 0.0
  %934 = vmatpush1.msra.mxu0 %v739
  %935 = vmatprep.subr.mxu0 0.0
  %936 = vmatpush1.msra.mxu0 %v738
  %937 = vmatprep.subr.mxu0 0.0
  %938 = vmatpush2.msra.mxu0 0.0
  %939 = vmatprep.subr.mxu0 0.0
  %940 = vmatpush2.msra.mxu0 0.0
  %941 = vmatprep.subr.mxu0 0.0
  %942 = vmatpush2.msra.mxu0 0.0
  %943 = vmatprep.subr.mxu0 0.0
  %944 = vmatpush2.msra.mxu0 0.0
  %945 = vmatprep.subr.mxu0 0.0
  %946 = vmatpush2.msra.mxu0 0.0
  %947 = vmatprep.subr.mxu0 0.0
  %948 = vmatpush2.msra.mxu0 0.0
  %949 = vmatprep.subr.mxu0 0.0
  %950 = vmatpush2.msra.mxu0 0.0
  %951 = vmatprep.subr.mxu0 0.0
  %952 = vmatpush2.msra.mxu0 0.0
  %953 = vmatprep.subr.mxu0 0.0
  %954 = vmatpush2.msra.mxu0 0.0
  %955 = vmatprep.subr.mxu0 0.0
  %956 = vmatpush2.msra.mxu0 0.0
  %957 = vmatprep.subr.mxu0 0.0
  %958 = vmatpush2.msra.mxu0 0.0
  %959 = vmatprep.subr.mxu0 0.0
  %960 = vmatpush2.msra.mxu0 0.0
  %961 = vmatprep.subr.mxu0 0.0
  %962 = vmatpush2.msra.mxu0 0.0
  %963 = vmatprep.subr.mxu0 0.0
  %964 = vmatpush2.msra.mxu0 0.0
  %965 = vmatprep.subr.mxu0 0.0
  %966 = vmatpush2.msra.mxu0 0.0
  %967 = vmatprep.subr.mxu0 0.0
  %968 = vmatpush2.msra.mxu0 0.0
  %969 = vmatprep.mubr.f32.mxu0 0.0
  %970 = vmatmul.mubr.f32.gmra.mxu0 %v903
  %v971 = vpop.f32.mrf.mxu0
  %v972 = vadd.f32 %v900, %v971
  %v973 = vpop.f32.mrf.mxu0
  %974 = vdwg.mxu0
  %v975 = vtanh.pop %v972
  %v976 = vrot.slane %v820, 4
  %v979 = vsel %vm106, %v975, 0
  %981 = vmatprep.subr.mxu0 0.0
  %982 = vmatpush1.msra.mxu0 0.0
  %983 = vmatprep.subr.mxu0 0.0
  %984 = vmatpush1.msra.mxu0 0.0
  %985 = vmatprep.subr.mxu0 0.0
  %986 = vmatpush1.msra.mxu0 0.0
  %987 = vmatprep.subr.mxu0 0.0
  %988 = vmatpush1.msra.mxu0 0.0
  %989 = vmatprep.subr.mxu0 0.0
  %990 = vmatpush1.msra.mxu0 0.0
  %991 = vmatprep.subr.mxu0 0.0
  %992 = vmatpush1.msra.mxu0 0.0
  %993 = vmatprep.subr.mxu0 0.0
  %994 = vmatpush1.msra.mxu0 0.0
  %995 = vmatprep.subr.mxu0 0.0
  %996 = vmatpush1.msra.mxu0 0.0
  %997 = vmatprep.subr.mxu0 0.0
  %998 = vmatpush1.msra.mxu0 0.0
  %999 = vmatprep.subr.mxu0 0.0
  %1000 = vmatpush1.msra.mxu0 0.0
  %1001 = vmatprep.subr.mxu0 0.0
  %1002 = vmatpush1.msra.mxu0 0.0
  %1003 = vmatprep.subr.mxu0 0.0
  %1004 = vmatpush1.msra.mxu0 0.0
  %1005 = vmatprep.subr.mxu0 0.0
  %1006 = vmatpush1.msra.mxu0 %v741
  %1007 = vmatprep.subr.mxu0 0.0
  %1008 = vmatpush1.msra.mxu0 %v740
  %1009 = vmatprep.subr.mxu0 0.0
  %1010 = vmatpush1.msra.mxu0 %v739
  %1011 = vmatprep.subr.mxu0 0.0
  %1012 = vmatpush1.msra.mxu0 %v738
  %1013 = vmatprep.subr.mxu0 0.0
  %1014 = vmatpush2.msra.mxu0 0.0
  %1015 = vmatprep.subr.mxu0 0.0
  %1016 = vmatpush2.msra.mxu0 0.0
  %1017 = vmatprep.subr.mxu0 0.0
  %1018 = vmatpush2.msra.mxu0 0.0
  %1019 = vmatprep.subr.mxu0 0.0
  %1020 = vmatpush2.msra.mxu0 0.0
  %1021 = vmatprep.subr.mxu0 0.0
  %1022 = vmatpush2.msra.mxu0 0.0
  %1023 = vmatprep.subr.mxu0 0.0
  %1024 = vmatpush2.msra.mxu0 0.0
  %1025 = vmatprep.subr.mxu0 0.0
  %1026 = vmatpush2.msra.mxu0 0.0
  %1027 = vmatprep.subr.mxu0 0.0
  %1028 = vmatpush2.msra.mxu0 0.0
  %1029 = vmatprep.subr.mxu0 0.0
  %1030 = vmatpush2.msra.mxu0 0.0
  %1031 = vmatprep.subr.mxu0 0.0
  %1032 = vmatpush2.msra.mxu0 0.0
  %1033 = vmatprep.subr.mxu0 0.0
  %1034 = vmatpush2.msra.mxu0 0.0
  %1035 = vmatprep.subr.mxu0 0.0
  %1036 = vmatpush2.msra.mxu0 0.0
  %1037 = vmatprep.subr.mxu0 0.0
  %1038 = vmatpush2.msra.mxu0 0.0
  %1039 = vmatprep.subr.mxu0 0.0
  %1040 = vmatpush2.msra.mxu0 0.0
  %1041 = vmatprep.subr.mxu0 0.0
  %1042 = vmatpush2.msra.mxu0 0.0
  %1043 = vmatprep.subr.mxu0 0.0
  %1044 = vmatpush2.msra.mxu0 0.0
  %1045 = vmatprep.mubr.f32.mxu0 0.0
  %1046 = vmatmul.mubr.f32.gmra.mxu0 %v979
  %v1047 = vpop.f32.mrf.mxu0
  %v1048 = vadd.f32 %v976, %v1047
  %v1049 = vpop.f32.mrf.mxu0
  %1050 = vdwg.mxu0
  %v1051 = vtanh.pop %v1048
  %v1052 = vrot.slane %v820, 6
  %v1055 = vsel %vm106, %v1051, 0
  %1057 = vmatprep.subr.mxu0 0.0
  %1058 = vmatpush1.msra.mxu0 0.0
  %1059 = vmatprep.subr.mxu0 0.0
  %1060 = vmatpush1.msra.mxu0 0.0
  %1061 = vmatprep.subr.mxu0 0.0
  %1062 = vmatpush1.msra.mxu0 0.0
  %1063 = vmatprep.subr.mxu0 0.0
  %1064 = vmatpush1.msra.mxu0 0.0
  %1065 = vmatprep.subr.mxu0 0.0
  %1066 = vmatpush1.msra.mxu0 0.0
  %1067 = vmatprep.subr.mxu0 0.0
  %1068 = vmatpush1.msra.mxu0 0.0
  %1069 = vmatprep.subr.mxu0 0.0
  %1070 = vmatpush1.msra.mxu0 0.0
  %1071 = vmatprep.subr.mxu0 0.0
  %1072 = vmatpush1.msra.mxu0 0.0
  %1073 = vmatprep.subr.mxu0 0.0
  %1074 = vmatpush1.msra.mxu0 0.0
  %1075 = vmatprep.subr.mxu0 0.0
  %1076 = vmatpush1.msra.mxu0 0.0
  %1077 = vmatprep.subr.mxu0 0.0
  %1078 = vmatpush1.msra.mxu0 0.0
  %1079 = vmatprep.subr.mxu0 0.0
  %1080 = vmatpush1.msra.mxu0 0.0
  %1081 = vmatprep.subr.mxu0 0.0
  %1082 = vmatpush1.msra.mxu0 %v741
  %1083 = vmatprep.subr.mxu0 0.0
  %1084 = vmatpush1.msra.mxu0 %v740
  %1085 = vmatprep.subr.mxu0 0.0
  %1086 = vmatpush1.msra.mxu0 %v739
  %1087 = vmatprep.subr.mxu0 0.0
  %1088 = vmatpush1.msra.mxu0 %v738
  %1089 = vmatprep.subr.mxu0 0.0
  %1090 = vmatpush2.msra.mxu0 0.0
  %1091 = vmatprep.subr.mxu0 0.0
  %1092 = vmatpush2.msra.mxu0 0.0
  %1093 = vmatprep.subr.mxu0 0.0
  %1094 = vmatpush2.msra.mxu0 0.0
  %1095 = vmatprep.subr.mxu0 0.0
  %1096 = vmatpush2.msra.mxu0 0.0
  %1097 = vmatprep.subr.mxu0 0.0
  %1098 = vmatpush2.msra.mxu0 0.0
  %1099 = vmatprep.subr.mxu0 0.0
  %1100 = vmatpush2.msra.mxu0 0.0
  %1101 = vmatprep.subr.mxu0 0.0
  %1102 = vmatpush2.msra.mxu0 0.0
  %1103 = vmatprep.subr.mxu0 0.0
  %1104 = vmatpush2.msra.mxu0 0.0
  %1105 = vmatprep.subr.mxu0 0.0
  %1106 = vmatpush2.msra.mxu0 0.0
  %1107 = vmatprep.subr.mxu0 0.0
  %1108 = vmatpush2.msra.mxu0 0.0
  %1109 = vmatprep.subr.mxu0 0.0
  %1110 = vmatpush2.msra.mxu0 0.0
  %1111 = vmatprep.subr.mxu0 0.0
  %1112 = vmatpush2.msra.mxu0 0.0
  %1113 = vmatprep.subr.mxu0 0.0
  %1114 = vmatpush2.msra.mxu0 0.0
  %1115 = vmatprep.subr.mxu0 0.0
  %1116 = vmatpush2.msra.mxu0 0.0
  %1117 = vmatprep.subr.mxu0 0.0
  %1118 = vmatpush2.msra.mxu0 0.0
  %1119 = vmatprep.subr.mxu0 0.0
  %1120 = vmatpush2.msra.mxu0 0.0
  %1121 = vmatprep.mubr.f32.mxu0 0.0
  %1122 = vmatmul.mubr.f32.gmra.mxu0 %v1055
  %v1123 = vpop.f32.mrf.mxu0
  %v1124 = vadd.f32 %v1052, %v1123
  %v1125 = vpop.f32.mrf.mxu0
  %1126 = vdwg.mxu0
  %v1127 = vtanh.pop %v1124
  %v1129 = vsel %vm106, %v1127, 0
  %1131 = vmatprep.subr.mxu0 0.0
  %1132 = vmatpush1.msra.mxu0 0.0
  %1133 = vmatprep.subr.mxu0 0.0
  %1134 = vmatpush1.msra.mxu0 0.0
  %1135 = vmatprep.subr.mxu0 0.0
  %1136 = vmatpush1.msra.mxu0 0.0
  %1137 = vmatprep.subr.mxu0 0.0
  %1138 = vmatpush1.msra.mxu0 0.0
  %1139 = vmatprep.subr.mxu0 0.0
  %1140 = vmatpush1.msra.mxu0 0.0
  %1141 = vmatprep.subr.mxu0 0.0
  %1142 = vmatpush1.msra.mxu0 0.0
  %1143 = vmatprep.subr.mxu0 0.0
  %1144 = vmatpush1.msra.mxu0 0.0
  %1145 = vmatprep.subr.mxu0 0.0
  %1146 = vmatpush1.msra.mxu0 0.0
  %1147 = vmatprep.subr.mxu0 0.0
  %1148 = vmatpush1.msra.mxu0 0.0
  %1149 = vmatprep.subr.mxu0 0.0
  %1150 = vmatpush1.msra.mxu0 0.0
  %1151 = vmatprep.subr.mxu0 0.0
  %1152 = vmatpush1.msra.mxu0 0.0
  %1153 = vmatprep.subr.mxu0 0.0
  %1154 = vmatpush1.msra.mxu0 0.0
  %1155 = vmatprep.subr.mxu0 0.0
  %1156 = vmatpush1.msra.mxu0 %v741
  %1157 = vmatprep.subr.mxu0 0.0
  %1158 = vmatpush1.msra.mxu0 %v740
  %1159 = vmatprep.subr.mxu0 0.0
  %1160 = vmatpush1.msra.mxu0 %v739
  %1161 = vmatprep.subr.mxu0 0.0
  %1162 = vmatpush1.msra.mxu0 %v738
  %1163 = vmatprep.subr.mxu0 0.0
  %1164 = vmatpush2.msra.mxu0 0.0
  %1165 = vmatprep.subr.mxu0 0.0
  %1166 = vmatpush2.msra.mxu0 0.0
  %1167 = vmatprep.subr.mxu0 0.0
  %1168 = vmatpush2.msra.mxu0 0.0
  %1169 = vmatprep.subr.mxu0 0.0
  %1170 = vmatpush2.msra.mxu0 0.0
  %1171 = vmatprep.subr.mxu0 0.0
  %1172 = vmatpush2.msra.mxu0 0.0
  %1173 = vmatprep.subr.mxu0 0.0
  %1174 = vmatpush2.msra.mxu0 0.0
  %1175 = vmatprep.subr.mxu0 0.0
  %1176 = vmatpush2.msra.mxu0 0.0
  %1177 = vmatprep.subr.mxu0 0.0
  %1178 = vmatpush2.msra.mxu0 0.0
  %1179 = vmatprep.subr.mxu0 0.0
  %1180 = vmatpush2.msra.mxu0 0.0
  %1181 = vmatprep.subr.mxu0 0.0
  %1182 = vmatpush2.msra.mxu0 0.0
  %1183 = vmatprep.subr.mxu0 0.0
  %1184 = vmatpush2.msra.mxu0 0.0
  %1185 = vmatprep.subr.mxu0 0.0
  %1186 = vmatpush2.msra.mxu0 0.0
  %1187 = vmatprep.subr.mxu0 0.0
  %1188 = vmatpush2.msra.mxu0 0.0
  %1189 = vmatprep.subr.mxu0 0.0
  %1190 = vmatpush2.msra.mxu0 0.0
  %1191 = vmatprep.subr.mxu0 0.0
  %1192 = vmatpush2.msra.mxu0 0.0
  %1193 = vmatprep.subr.mxu0 0.0
  %1194 = vmatpush2.msra.mxu0 0.0
  %1195 = vmatprep.mubr.f32.mxu0 0.0
  %1196 = vmatmul.mubr.f32.gmra.mxu0 %v1129
  %v1197 = vpop.f32.mrf.mxu0
  %v1198 = vadd.f32 %v825, %v1197
  %v1199 = vpop.f32.mrf.mxu0
  %1200 = vdwg.mxu0
  %v1201 = vtanh.pop %v1198
  %v1203 = vrot.slane %v825, 2
  %v1206 = vsel %vm106, %v1201, 0
  %1208 = vmatprep.subr.mxu0 0.0
  %1209 = vmatpush1.msra.mxu0 0.0
  %1210 = vmatprep.subr.mxu0 0.0
  %1211 = vmatpush1.msra.mxu0 0.0
  %1212 = vmatprep.subr.mxu0 0.0
  %1213 = vmatpush1.msra.mxu0 0.0
  %1214 = vmatprep.subr.mxu0 0.0
  %1215 = vmatpush1.msra.mxu0 0.0
  %1216 = vmatprep.subr.mxu0 0.0
  %1217 = vmatpush1.msra.mxu0 0.0
  %1218 = vmatprep.subr.mxu0 0.0
  %1219 = vmatpush1.msra.mxu0 0.0
  %1220 = vmatprep.subr.mxu0 0.0
  %1221 = vmatpush1.msra.mxu0 0.0
  %1222 = vmatprep.subr.mxu0 0.0
  %1223 = vmatpush1.msra.mxu0 0.0
  %1224 = vmatprep.subr.mxu0 0.0
  %1225 = vmatpush1.msra.mxu0 0.0
  %1226 = vmatprep.subr.mxu0 0.0
  %1227 = vmatpush1.msra.mxu0 0.0
  %1228 = vmatprep.subr.mxu0 0.0
  %1229 = vmatpush1.msra.mxu0 0.0
  %1230 = vmatprep.subr.mxu0 0.0
  %1231 = vmatpush1.msra.mxu0 0.0
  %1232 = vmatprep.subr.mxu0 0.0
  %1233 = vmatpush1.msra.mxu0 %v741
  %1234 = vmatprep.subr.mxu0 0.0
  %1235 = vmatpush1.msra.mxu0 %v740
  %1236 = vmatprep.subr.mxu0 0.0
  %1237 = vmatpush1.msra.mxu0 %v739
  %1238 = vmatprep.subr.mxu0 0.0
  %1239 = vmatpush1.msra.mxu0 %v738
  %1240 = vmatprep.subr.mxu0 0.0
  %1241 = vmatpush2.msra.mxu0 0.0
  %1242 = vmatprep.subr.mxu0 0.0
  %1243 = vmatpush2.msra.mxu0 0.0
  %1244 = vmatprep.subr.mxu0 0.0
  %1245 = vmatpush2.msra.mxu0 0.0
  %1246 = vmatprep.subr.mxu0 0.0
  %1247 = vmatpush2.msra.mxu0 0.0
  %1248 = vmatprep.subr.mxu0 0.0
  %1249 = vmatpush2.msra.mxu0 0.0
  %1250 = vmatprep.subr.mxu0 0.0
  %1251 = vmatpush2.msra.mxu0 0.0
  %1252 = vmatprep.subr.mxu0 0.0
  %1253 = vmatpush2.msra.mxu0 0.0
  %1254 = vmatprep.subr.mxu0 0.0
  %1255 = vmatpush2.msra.mxu0 0.0
  %1256 = vmatprep.subr.mxu0 0.0
  %1257 = vmatpush2.msra.mxu0 0.0
  %1258 = vmatprep.subr.mxu0 0.0
  %1259 = vmatpush2.msra.mxu0 0.0
  %1260 = vmatprep.subr.mxu0 0.0
  %1261 = vmatpush2.msra.mxu0 0.0
  %1262 = vmatprep.subr.mxu0 0.0
  %1263 = vmatpush2.msra.mxu0 0.0
  %1264 = vmatprep.subr.mxu0 0.0
  %1265 = vmatpush2.msra.mxu0 0.0
  %1266 = vmatprep.subr.mxu0 0.0
  %1267 = vmatpush2.msra.mxu0 0.0
  %1268 = vmatprep.subr.mxu0 0.0
  %1269 = vmatpush2.msra.mxu0 0.0
  %1270 = vmatprep.subr.mxu0 0.0
  %1271 = vmatpush2.msra.mxu0 0.0
  %1272 = vmatprep.mubr.f32.mxu0 0.0
  %1273 = vmatmul.mubr.f32.gmra.mxu0 %v1206
  %v1274 = vpop.f32.mrf.mxu0
  %v1275 = vadd.f32 %v1203, %v1274
  %v1276 = vpop.f32.mrf.mxu0
  %1277 = vdwg.mxu0
  %v1278 = vtanh.pop %v1275
  %v1279 = vrot.slane %v825, 4
  %v1282 = vsel %vm106, %v1278, 0
  %1284 = vmatprep.subr.mxu0 0.0
  %1285 = vmatpush1.msra.mxu0 0.0
  %1286 = vmatprep.subr.mxu0 0.0
  %1287 = vmatpush1.msra.mxu0 0.0
  %1288 = vmatprep.subr.mxu0 0.0
  %1289 = vmatpush1.msra.mxu0 0.0
  %1290 = vmatprep.subr.mxu0 0.0
  %1291 = vmatpush1.msra.mxu0 0.0
  %1292 = vmatprep.subr.mxu0 0.0
  %1293 = vmatpush1.msra.mxu0 0.0
  %1294 = vmatprep.subr.mxu0 0.0
  %1295 = vmatpush1.msra.mxu0 0.0
  %1296 = vmatprep.subr.mxu0 0.0
  %1297 = vmatpush1.msra.mxu0 0.0
  %1298 = vmatprep.subr.mxu0 0.0
  %1299 = vmatpush1.msra.mxu0 0.0
  %1300 = vmatprep.subr.mxu0 0.0
  %1301 = vmatpush1.msra.mxu0 0.0
  %1302 = vmatprep.subr.mxu0 0.0
  %1303 = vmatpush1.msra.mxu0 0.0
  %1304 = vmatprep.subr.mxu0 0.0
  %1305 = vmatpush1.msra.mxu0 0.0
  %1306 = vmatprep.subr.mxu0 0.0
  %1307 = vmatpush1.msra.mxu0 0.0
  %1308 = vmatprep.subr.mxu0 0.0
  %1309 = vmatpush1.msra.mxu0 %v741
  %1310 = vmatprep.subr.mxu0 0.0
  %1311 = vmatpush1.msra.mxu0 %v740
  %1312 = vmatprep.subr.mxu0 0.0
  %1313 = vmatpush1.msra.mxu0 %v739
  %1314 = vmatprep.subr.mxu0 0.0
  %1315 = vmatpush1.msra.mxu0 %v738
  %1316 = vmatprep.subr.mxu0 0.0
  %1317 = vmatpush2.msra.mxu0 0.0
  %1318 = vmatprep.subr.mxu0 0.0
  %1319 = vmatpush2.msra.mxu0 0.0
  %1320 = vmatprep.subr.mxu0 0.0
  %1321 = vmatpush2.msra.mxu0 0.0
  %1322 = vmatprep.subr.mxu0 0.0
  %1323 = vmatpush2.msra.mxu0 0.0
  %1324 = vmatprep.subr.mxu0 0.0
  %1325 = vmatpush2.msra.mxu0 0.0
  %1326 = vmatprep.subr.mxu0 0.0
  %1327 = vmatpush2.msra.mxu0 0.0
  %1328 = vmatprep.subr.mxu0 0.0
  %1329 = vmatpush2.msra.mxu0 0.0
  %1330 = vmatprep.subr.mxu0 0.0
  %1331 = vmatpush2.msra.mxu0 0.0
  %1332 = vmatprep.subr.mxu0 0.0
  %1333 = vmatpush2.msra.mxu0 0.0
  %1334 = vmatprep.subr.mxu0 0.0
  %1335 = vmatpush2.msra.mxu0 0.0
  %1336 = vmatprep.subr.mxu0 0.0
  %1337 = vmatpush2.msra.mxu0 0.0
  %1338 = vmatprep.subr.mxu0 0.0
  %1339 = vmatpush2.msra.mxu0 0.0
  %1340 = vmatprep.subr.mxu0 0.0
  %1341 = vmatpush2.msra.mxu0 0.0
  %1342 = vmatprep.subr.mxu0 0.0
  %1343 = vmatpush2.msra.mxu0 0.0
  %1344 = vmatprep.subr.mxu0 0.0
  %1345 = vmatpush2.msra.mxu0 0.0
  %1346 = vmatprep.subr.mxu0 0.0
  %1347 = vmatpush2.msra.mxu0 0.0
  %1348 = vmatprep.mubr.f32.mxu0 0.0
  %1349 = vmatmul.mubr.f32.gmra.mxu0 %v1282
  %v1350 = vpop.f32.mrf.mxu0
  %v1351 = vadd.f32 %v1279, %v1350
  %v1352 = vpop.f32.mrf.mxu0
  %1353 = vdwg.mxu0
  %v1354 = vtanh.pop %v1351
  %v1355 = vrot.slane %v825, 6
  %v1358 = vsel %vm106, %v1354, 0
  %1360 = vmatprep.subr.mxu0 0.0
  %1361 = vmatpush1.msra.mxu0 0.0
  %1362 = vmatprep.subr.mxu0 0.0
  %1363 = vmatpush1.msra.mxu0 0.0
  %1364 = vmatprep.subr.mxu0 0.0
  %1365 = vmatpush1.msra.mxu0 0.0
  %1366 = vmatprep.subr.mxu0 0.0
  %1367 = vmatpush1.msra.mxu0 0.0
  %1368 = vmatprep.subr.mxu0 0.0
  %1369 = vmatpush1.msra.mxu0 0.0
  %1370 = vmatprep.subr.mxu0 0.0
  %1371 = vmatpush1.msra.mxu0 0.0
  %1372 = vmatprep.subr.mxu0 0.0
  %1373 = vmatpush1.msra.mxu0 0.0
  %1374 = vmatprep.subr.mxu0 0.0
  %1375 = vmatpush1.msra.mxu0 0.0
  %1376 = vmatprep.subr.mxu0 0.0
  %1377 = vmatpush1.msra.mxu0 0.0
  %1378 = vmatprep.subr.mxu0 0.0
  %1379 = vmatpush1.msra.mxu0 0.0
  %1380 = vmatprep.subr.mxu0 0.0
  %1381 = vmatpush1.msra.mxu0 0.0
  %1382 = vmatprep.subr.mxu0 0.0
  %1383 = vmatpush1.msra.mxu0 0.0
  %1384 = vmatprep.subr.mxu0 0.0
  %1385 = vmatpush1.msra.mxu0 %v741
  %1386 = vmatprep.subr.mxu0 0.0
  %1387 = vmatpush1.msra.mxu0 %v740
  %1388 = vmatprep.subr.mxu0 0.0
  %1389 = vmatpush1.msra.mxu0 %v739
  %1390 = vmatprep.subr.mxu0 0.0
  %1391 = vmatpush1.msra.mxu0 %v738
  %1392 = vmatprep.subr.mxu0 0.0
  %1393 = vmatpush2.msra.mxu0 0.0
  %1394 = vmatprep.subr.mxu0 0.0
  %1395 = vmatpush2.msra.mxu0 0.0
  %1396 = vmatprep.subr.mxu0 0.0
  %1397 = vmatpush2.msra.mxu0 0.0
  %1398 = vmatprep.subr.mxu0 0.0
  %1399 = vmatpush2.msra.mxu0 0.0
  %1400 = vmatprep.subr.mxu0 0.0
  %1401 = vmatpush2.msra.mxu0 0.0
  %1402 = vmatprep.subr.mxu0 0.0
  %1403 = vmatpush2.msra.mxu0 0.0
  %1404 = vmatprep.subr.mxu0 0.0
  %1405 = vmatpush2.msra.mxu0 0.0
  %1406 = vmatprep.subr.mxu0 0.0
  %1407 = vmatpush2.msra.mxu0 0.0
  %1408 = vmatprep.subr.mxu0 0.0
  %1409 = vmatpush2.msra.mxu0 0.0
  %1410 = vmatprep.subr.mxu0 0.0
  %1411 = vmatpush2.msra.mxu0 0.0
  %1412 = vmatprep.subr.mxu0 0.0
  %1413 = vmatpush2.msra.mxu0 0.0
  %1414 = vmatprep.subr.mxu0 0.0
  %1415 = vmatpush2.msra.mxu0 0.0
  %1416 = vmatprep.subr.mxu0 0.0
  %1417 = vmatpush2.msra.mxu0 0.0
  %1418 = vmatprep.subr.mxu0 0.0
  %1419 = vmatpush2.msra.mxu0 0.0
  %1420 = vmatprep.subr.mxu0 0.0
  %1421 = vmatpush2.msra.mxu0 0.0
  %1422 = vmatprep.subr.mxu0 0.0
  %1423 = vmatpush2.msra.mxu0 0.0
  %1424 = vmatprep.mubr.f32.mxu0 0.0
  %1425 = vmatmul.mubr.f32.gmra.mxu0 %v1358
  %v1426 = vpop.f32.mrf.mxu0
  %v1427 = vadd.f32 %v1355, %v1426
  %v1428 = vpop.f32.mrf.mxu0
  %1429 = vdwg.mxu0
  %v1430 = vtanh.pop %v1427
  %v1432 = vrot.slane %v1430, 6
  %v1434 = vsel %vm726, %v712, %v1432
  %v1435 = vmax.f32 %v1434, 0.0
  %v1436 = vld [vmem:[%s0 + $0x88] sm:$0x1]
  %v1437 = vld [vmem:[%s0 + $0x90] sm:$0x1]
  %v1438 = vlaneseq
  %v1439 = vshrl.u32 %v1438, 7
  %v1440 = vsub.s32 0, %v1439
  %v1441 = vrot.slane %v1436, %v1440
  %v1442 = vmul.f32 %v1435, %v1441
  %vm1443 = vcmask 257024
  %v1444 = vsel %vm1443, %v1442, 0.0
  %1445 = vadd.xlane.f32.xlu0 %v1444
  %v1446 = vpop.xlane.xlu0 %1445
  %v1447 = vlaneseq
  %v1448 = vshrl.u32 %v1447, 7
  %v1449 = vsub.s32 0, %v1448
  %v1450 = vrot.slane %v1437, %v1449
  %v1451 = vadd.f32 %v1446, %v1450
  %vm1452 = vcmask 3072
  %1453 = vst.msk [vmem:[%s1] sm:$0xf] %vm1452, %v1451
  // Predicated region
  $region6: #{tpu_custom_call.1} parent=0 // pred_check
    _
  $region7: #{tpu_custom_call.1} parent=0 // pred_check_branch
    %1455 = sbr.rel (0) target = $region9
  $region8: #{tpu_custom_call.1} parent=0 // pred_region
    _
  $region9: #{tpu_custom_call.1} parent=0 // pred_fallthru
    _
  // Predicated region
  $region10: #{tpu_custom_call.1} parent=0 // pred_check
    _
  $region11: #{tpu_custom_call.1} parent=0 // pred_check_branch
    %1457 = sbr.rel (0) target = $region13
  $region12: #{tpu_custom_call.1} parent=0 // pred_region
    _
  $region13: #{tpu_custom_call.1} parent=0 // pred_fallthru
    _

</llo_original>
